<compile_context>
chip_gen: v7x
topology: tpu7x:2x2x1
jax: 0.10.0
libtpu: 0.0.40
codegen_flags: <defaults>
</compile_context>

<pallas_src>
import jax
import jax.numpy as jnp
from jax import lax
from jax.experimental import pallas as pl
from jax.experimental.pallas import tpu as pltpu

MAX_FLOW = 400.0
GAMMA = 0.8
W_SMOOTH = 0.5


def _raft_semantic_loss_kernel(gt_ref, vm_ref, s1_ref, s2_ref, *rest):
    """One (batch, H-tile) grid step.

    Inputs (VMEM):
      gt_ref : (2, TILE_H, W) f32   ground-truth flow (u, v)
      vm_ref : (TILE_H, W)    int8  validity mask (already thresholded, 0/1)
      s1_ref : (TILE_H, W)    int8  semantic labels, image 1
      s2_ref : (TILE_H, W)    int8  semantic labels, image 2
      rest[n]: (2, TILE_H, W) f32/bf16  prediction n            (n < n_preds)
    Output (VMEM, revisited across the H axis -> per-batch accumulator):
      out_ref: (2N+6, 8, W) f32 sublane-folded partial sums
        row 2n   : sum(|du|+|dv| * valid)         for pred n
        row 2n+1 : sum(loss_mask * semantic_map)  for pred n
        row 2N   : sum(valid)
        row 2N+1 : sum(loss_mask)
        row 2N+2..2N+5 : EPE / <1px / <3px / <5px partials (last pred only)
    Scratch:
      carry_ref: (2N+1, W) f32 last row of s1 / u_n / v_n of the previous tile.
    """
    carry_ref = rest[-1]
    out_ref = rest[-2]
    pred_refs = rest[:-2]
    n_preds = len(pred_refs)
    tile_h, w = vm_ref.shape
    n_fold = tile_h // 8
    h = pl.program_id(1)
    f32 = jnp.float32

    # New batch entry (h == 0): reset the per-batch accumulator and the carry.
    @pl.when(h == 0)
    def _():
        out_ref[...] = jnp.zeros_like(out_ref)
        carry_ref[...] = jnp.zeros_like(carry_ref)

    ug = gt_ref[0].astype(f32)
    vg = gt_ref[1].astype(f32)
    s1 = s1_ref[...].astype(f32)          # small int labels -> exact in f32
    s2 = s2_ref[...].astype(f32)
    vm = vm_ref[...].astype(f32)

    # valid = (valid_mask) & (||flow_gt||^2 < MAX_FLOW^2)   (no sqrt)
    validb = jnp.logical_and(vm > 0.0, ug * ug + vg * vg < MAX_FLOW * MAX_FLOW)
    validf = validb.astype(f32)

    # Global row / column boundary masks (replace the [:, 1:, 1:] crops).
    row_l = lax.broadcasted_iota(jnp.int32, (tile_h, w), 0)
    col = lax.broadcasted_iota(jnp.int32, (tile_h, w), 1)
    row_g = row_l + h * tile_h
    m_r1 = row_g >= 1                      # drop global row 0
    m_c1 = col >= 1                        # drop column 0 (vertical term)
    m_cle = col < (w - 1)                  # drop last column (horizontal term)
    is_row0 = row_l == 0                   # local row 0 -> take carried row

    # Shared (prediction-independent) semantic terms.  Booleans are combined
    # before the single cast to f32.
    maskb = jnp.logical_and(s1 == s2, validb)           # non_occ & valid
    maskf = maskb.astype(f32)
    mask_right = pltpu.roll(maskf, w - 1, axis=1)        # mask(r, c+1)
    s1_right = pltpu.roll(s1, w - 1, axis=1)             # s1(r, c+1)
    s1_prev = jnp.where(is_row0, carry_ref[0:1, :],      # s1(r-1, c)
                        pltpu.roll(s1, 1, axis=0))

    sem_den_b = jnp.logical_and(jnp.logical_and(m_r1, m_c1), maskb)
    sem_den = sem_den_b.astype(f32)
    by_w = jnp.logical_and(sem_den_b, s1_prev == s1).astype(f32)
    ax_w = (jnp.logical_and(jnp.logical_and(m_r1, m_cle),
                            s1 == s1_right).astype(f32) * mask_right)

    def fold8(img):                        # (tile_h, W) -> (8, W), pure VPU adds
        acc = img[0:8]
        for t in range(1, n_fold):
            acc = acc + img[t * 8:(t + 1) * 8]
        return acc

    def emit(k, img):                      # accumulate into the resident block
        out_ref[k, :, :] = out_ref[k, :, :] + fold8(img)

    emit(2 * n_preds, validf)
    emit(2 * n_preds + 1, sem_den)
    carry_ref[0:1, :] = s1[tile_h - 1:tile_h, :]         # carry s1 last row

    for n in range(n_preds):
        p_ref = pred_refs[n]
        u = p_ref[0].astype(f32)
        v = p_ref[1].astype(f32)

        du = u - ug
        dv = v - vg
        emit(2 * n, (jnp.abs(du) + jnp.abs(dv)) * validf)            # L1 term

        u_right = pltpu.roll(u, w - 1, axis=1)
        v_right = pltpu.roll(v, w - 1, axis=1)
        u_prev = jnp.where(is_row0, carry_ref[1 + 2 * n:2 + 2 * n, :],
                           pltpu.roll(u, 1, axis=0))
        v_prev = jnp.where(is_row0, carry_ref[2 + 2 * n:3 + 2 * n, :],
                           pltpu.roll(v, 1, axis=0))
        sem_t = (ax_w * (jnp.abs(u - u_right) + jnp.abs(v - v_right)) +
                 by_w * (jnp.abs(u_prev - u) + jnp.abs(v_prev - v)))
        emit(2 * n + 1, sem_t)

        carry_ref[1 + 2 * n:2 + 2 * n, :] = u[tile_h - 1:tile_h, :]
        carry_ref[2 + 2 * n:3 + 2 * n, :] = v[tile_h - 1:tile_h, :]

        if n == n_preds - 1:               # EPE metrics on the last prediction
            epe2 = du * du + dv * dv
            emit(2 * n_preds + 2, jnp.sqrt(epe2) * validf)
            emit(2 * n_preds + 3, jnp.logical_and(validb, epe2 < 1.0).astype(f32))
            emit(2 * n_preds + 4, jnp.logical_and(validb, epe2 < 9.0).astype(f32))
            emit(2 * n_preds + 5, jnp.logical_and(validb, epe2 < 25.0).astype(f32))


def _vmem_capacity_bytes():
    """Physical per-core VMEM; conservative 64 MiB (v7x) fallback."""
    try:
        info = pltpu.get_tpu_info()
        cap = getattr(info, "vmem_capacity_bytes", None)
        if cap:
            return int(cap)
    except Exception:
        pass
    return 64 * 1024 * 1024


def _pick_tile_h(H, W, n_preds, tile_h, budget):
    """Largest 32-row-multiple divisor of H (<=256) whose double-buffered DMA
    inputs + ~26 live (tile_h, W) f32 temporaries fit the VMEM budget."""
    if tile_h is not None:
        assert H % tile_h == 0, "tile_h must divide H"
        assert tile_h == H or tile_h % 32 == 0, \
            "multi-row tiles must be multiples of 32 (int8 sublane packing)"
        return tile_h
    # bytes per tile row: 2x double-buffered inputs + live f32 temporaries
    per_row = W * (2 * ((2 + 2 * n_preds) * 4 + 3) + 26 * 4)
    if H % 32 == 0:
        best = None
        for t in range(32, min(H, 256) + 1, 32):
            if H % t == 0 and t * per_row <= budget:
                best = t
        if best is not None:
            return best
        if H > 32:
            return 32          # nothing fits the soft budget; smallest legal tile
    return H                   # full-dim blocks are always legal


def raft_semantic_loss(flow_preds, flow_gt, valid_mask, semseg_gt_1, semseg_gt_2,
                       gamma=GAMMA, w_smooth=W_SMOOTH, tile_h=None):
    """Mirror of RaftSemanticLoss.forward (debug=False).

    Semantic labels are assumed to be small non-negative integer class ids
    (exact equality replaces |diff| < 1e-5).  flow_preds / flow_gt may be f32
    or bf16; accumulation is always f32 inside the kernel.
    """
    flow_preds = tuple(flow_preds)
    n_preds = len(flow_preds)
    B, C, H, W = flow_gt.shape
    assert C == 2
    assert H % 8 == 0, "H must be a multiple of 8"  # TODO(synk): pad/mask odd heights
    cap = _vmem_capacity_bytes()
    tile_h = _pick_tile_h(H, W, n_preds, tile_h, budget=int(cap * 0.45))
    n_h = H // tile_h
    n_rows = 2 * n_preds + 6

    flow_idx = lambda b, h: (b, 0, h, 0)
    plane_idx = lambda b, h: (b, h, 0)

    in_specs = ([pl.BlockSpec((None, 2, tile_h, W), flow_idx),     # flow_gt
                 pl.BlockSpec((None, tile_h, W), plane_idx),       # valid (int8)
                 pl.BlockSpec((None, tile_h, W), plane_idx),       # semseg_1 (int8)
                 pl.BlockSpec((None, tile_h, W), plane_idx)]       # semseg_2 (int8)
                + [pl.BlockSpec((None, 2, tile_h, W), flow_idx)    # predictions
                   for _ in range(n_preds)])

    call = pl.pallas_call(
        _raft_semantic_loss_kernel,
        grid=(B, n_h),
        in_specs=in_specs,
        # Per-batch accumulator block, revisited across the arbitrary H axis.
        out_specs=pl.BlockSpec((None, n_rows, 8, W), lambda b, h: (b, 0, 0, 0)),
        out_shape=jax.ShapeDtypeStruct((B, n_rows, 8, W), jnp.float32),
        scratch_shapes=[pltpu.VMEM((2 * n_preds + 1, W), jnp.float32)],
        compiler_params=pltpu.CompilerParams(
            dimension_semantics=("parallel", "arbitrary"),
            vmem_limit_bytes=int(cap * 0.7),
        ),
    )

    @jax.jit
    def run(flow_gt, valid_mask, s1, s2, preds):
        vm_i8 = (valid_mask >= 0.5).astype(jnp.int8)
        s1_i8 = s1.astype(jnp.int8)
        s2_i8 = s2.astype(jnp.int8)
        parts = call(flow_gt, vm_i8, s1_i8, s2_i8, *preds)   # (B, 2N+6, 8, W)
        sums = jnp.sum(parts, axis=(0, 2, 3))                # tiny final reduce
        valid_sum = sums[2 * n_preds]
        sem_den = sums[2 * n_preds + 1]
        total_flow = jnp.float32(0.0)
        total_sem = jnp.float32(0.0)
        for i in range(n_preds):
            wgt = gamma ** (n_preds - i - 1)
            total_flow = total_flow + wgt * sums[2 * i] / valid_sum
            total_sem = total_sem + wgt * sums[2 * i + 1] / sem_den
        total_loss = total_flow + w_smooth * total_sem
        metrics = {
            "flow_loss": total_flow,
            "semantic_loss": total_sem,
            "total_loss": total_loss,
            "epe": sums[2 * n_preds + 2] / valid_sum,
            "1px": sums[2 * n_preds + 3] / valid_sum,
            "3px": sums[2 * n_preds + 4] / valid_sum,
            "5px": sums[2 * n_preds + 5] / valid_sum,
        }
        return total_loss, metrics

    return run(flow_gt, valid_mask, semseg_gt_1, semseg_gt_2, flow_preds)


def _reference_loss(flow_preds, flow_gt, valid_mask, s1, s2,
                    gamma=GAMMA, w_smooth=W_SMOOTH, max_flow=MAX_FLOW):
    """Pure-jnp mirror of the PyTorch module (sanity check)."""
    mag = jnp.sqrt(jnp.sum(flow_gt ** 2, axis=1))
    valid = (valid_mask >= 0.5) & (mag < max_flow)
    validf = valid.astype(jnp.float32)
    n = len(flow_preds)
    tf, ts = 0.0, 0.0
    for i, fp in enumerate(flow_preds):
        w = gamma ** (n - i - 1)
        li = jnp.sum(jnp.abs(fp - flow_gt), axis=1)
        fl = jnp.sum(li * validf) / jnp.sum(validf)

        def grads(img):
            return img[:, :, :-1] - img[:, :, 1:], img[:, :-1, :] - img[:, 1:, :]

        ugx, ugy = grads(fp[:, 0])
        vgx, vgy = grads(fp[:, 1])
        sgx, sgy = grads(s1)
        wx = (jnp.abs(sgx) < 1e-5).astype(jnp.float32)
        wy = (jnp.abs(sgy) < 1e-5).astype(jnp.float32)
        lx = wx * jnp.abs(ugx) + wx * jnp.abs(vgx)
        ly = wy * jnp.abs(ugy) + wy * jnp.abs(vgy)
        sm = lx[:, 1:, :] + ly[:, :, 1:]
        no = (jnp.abs(s1 - s2) < 1e-5)[:, 1:, 1:]
        m = (no & valid[:, 1:, 1:]).astype(jnp.float32)
        sl = jnp.sum(m * sm) / jnp.sum(m)
        tf = tf + w * fl
        ts = ts + w * sl
    d = flow_preds[-1] - flow_gt
    epe = jnp.sqrt(jnp.sum(d * d, axis=1))
    epe_mean = jnp.sum(epe * validf) / jnp.sum(validf)
    return tf + w_smooth * ts, epe_mean


if __name__ == "__main__":
    B, H, W = 2, 64, 128
    num_preds = 3

    key = jax.random.PRNGKey(0)
    keys = jax.random.split(key, num_preds + 4)
    flow_preds = [
        jax.random.normal(keys[i], (B, 2, H, W), dtype=jnp.float32) * 2.0
        for i in range(num_preds)
    ]
    flow_gt = jax.random.normal(keys[num_preds], (B, 2, H, W), jnp.float32) * 2.0
    valid_mask = (jax.random.uniform(keys[num_preds + 1], (B, H, W)) > 0.3
                  ).astype(jnp.float32)
    semseg_gt_1 = jax.random.randint(keys[num_preds + 2], (B, H, W), 0, 4
                                     ).astype(jnp.float32)
    semseg_gt_2 = jax.random.randint(keys[num_preds + 3], (B, H, W), 0, 4
                                     ).astype(jnp.float32)

    ref_total, ref_epe = _reference_loss(
        flow_preds, flow_gt, valid_mask, semseg_gt_1, semseg_gt_2)
    ref_total, ref_epe = float(ref_total), float(ref_epe)

    # tile_h=32 exercises the multi-tile carry/accumulator path; None -> auto.
    for th in (32, None):
        total_loss, metrics = raft_semantic_loss(
            flow_preds, flow_gt, valid_mask, semseg_gt_1, semseg_gt_2, tile_h=th)
        total_loss = jax.block_until_ready(total_loss)
        metrics = jax.tree_util.tree_map(jax.block_until_ready, metrics)
        assert abs(float(total_loss) - ref_total) < 1e-3 * max(1.0, abs(ref_total)), \
            (th, float(total_loss), ref_total)
        assert abs(float(metrics["epe"]) - ref_epe) < 1e-3 * max(1.0, abs(ref_epe)), \
            (th, float(metrics["epe"]), ref_epe)

    print("KERNEL_OK")
</pallas_src>

<mosaic_0001>
module attributes {stable_mosaic.version = 11 : i64} {
  func.func @_raft_semantic_loss_kernel(%arg0: i32, %arg1: i32, %arg2: memref<1x2x32x128xf32, #tpu.memory_space<vmem>>, %arg3: memref<1x32x128xi8, #tpu.memory_space<vmem>>, %arg4: memref<1x32x128xi8, #tpu.memory_space<vmem>>, %arg5: memref<1x32x128xi8, #tpu.memory_space<vmem>>, %arg6: memref<1x2x32x128xf32, #tpu.memory_space<vmem>>, %arg7: memref<1x2x32x128xf32, #tpu.memory_space<vmem>>, %arg8: memref<1x2x32x128xf32, #tpu.memory_space<vmem>>, %arg9: memref<1x12x8x128xf32, #tpu.memory_space<vmem>>, %arg10: memref<7x128xf32, #tpu.memory_space<vmem>>) attributes {dimension_semantics = [#tpu.dimension_semantics<parallel>, #tpu.dimension_semantics<arbitrary>], iteration_bounds = array<i64: 2, 2>, scalar_prefetch = 0 : i64, scratch_operands = 1 : i64, tpu.core_type = #tpu.core_type<tc>, window_params = [{transform_indices = @transform_0, window_bounds = array<i64: 1, 2, 32, 128>}, {transform_indices = @transform_1, window_bounds = array<i64: 1, 32, 128>}, {transform_indices = @transform_2, window_bounds = array<i64: 1, 32, 128>}, {transform_indices = @transform_3, window_bounds = array<i64: 1, 32, 128>}, {transform_indices = @transform_4, window_bounds = array<i64: 1, 2, 32, 128>}, {transform_indices = @transform_5, window_bounds = array<i64: 1, 2, 32, 128>}, {transform_indices = @transform_6, window_bounds = array<i64: 1, 2, 32, 128>}, {transform_indices = @transform_7, window_bounds = array<i64: 1, 12, 8, 128>}]} {
    %c0_i32 = arith.constant 0 : i32
    %0 = arith.cmpi eq, %arg1, %c0_i32 : i32
    %1 = arith.extui %0 : i1 to i32
    %c0_i32_0 = arith.constant 0 : i32
    %2 = arith.cmpi ne, %1, %c0_i32_0 : i32
    scf.if %2 {
      %cst_175 = arith.constant 0.000000e+00 : f32
      %359 = vector.broadcast %cst_175 : f32 to vector<12x8x128xf32>
      %c0_176 = arith.constant 0 : index
      %c0_177 = arith.constant 0 : index
      %c0_178 = arith.constant 0 : index
      %c0_179 = arith.constant 0 : index
      %360 = vector.load %arg9[%c0_176, %c0_177, %c0_178, %c0_179] : memref<1x12x8x128xf32, #tpu.memory_space<vmem>>, vector<1x12x8x128xf32>
      %361 = vector.shape_cast %360 : vector<1x12x8x128xf32> to vector<12x8x128xf32>
      %362 = vector.shape_cast %359 : vector<12x8x128xf32> to vector<1x12x8x128xf32>
      tpu.vector_store %arg9[%c0_176, %c0_177, %c0_178, %c0_179], %362 {strides = array<i32>} : memref<1x12x8x128xf32, #tpu.memory_space<vmem>>, vector<1x12x8x128xf32>,
      %cst_180 = arith.constant 0.000000e+00 : f32
      %363 = vector.broadcast %cst_180 : f32 to vector<7x128xf32>
      %c0_181 = arith.constant 0 : index
      %c0_182 = arith.constant 0 : index
      %364 = vector.load %arg10[%c0_181, %c0_182] : memref<7x128xf32, #tpu.memory_space<vmem>>, vector<7x128xf32>
      tpu.vector_store %arg10[%c0_181, %c0_182], %363 {strides = array<i32>} : memref<7x128xf32, #tpu.memory_space<vmem>>, vector<7x128xf32>,
    } else {
    }
    %c0 = arith.constant 0 : index
    %c0_1 = arith.constant 0 : index
    %c0_2 = arith.constant 0 : index
    %c0_3 = arith.constant 0 : index
    %3 = vector.load %arg2[%c0, %c0_1, %c0_2, %c0_3] : memref<1x2x32x128xf32, #tpu.memory_space<vmem>>, vector<1x1x32x128xf32>
    %4 = vector.shape_cast %3 : vector<1x1x32x128xf32> to vector<32x128xf32>
    %c0_4 = arith.constant 0 : index
    %c1 = arith.constant 1 : index
    %c0_5 = arith.constant 0 : index
    %c0_6 = arith.constant 0 : index
    %5 = vector.load %arg2[%c0_4, %c1, %c0_5, %c0_6] : memref<1x2x32x128xf32, #tpu.memory_space<vmem>>, vector<1x1x32x128xf32>
    %6 = vector.shape_cast %5 : vector<1x1x32x128xf32> to vector<32x128xf32>
    %c0_7 = arith.constant 0 : index
    %c0_8 = arith.constant 0 : index
    %c0_9 = arith.constant 0 : index
    %7 = vector.load %arg4[%c0_7, %c0_8, %c0_9] : memref<1x32x128xi8, #tpu.memory_space<vmem>>, vector<1x32x128xi8>
    %8 = vector.shape_cast %7 : vector<1x32x128xi8> to vector<32x128xi8>
    %9 = arith.sitofp %8 : vector<32x128xi8> to vector<32x128xf32>
    %c0_10 = arith.constant 0 : index
    %c0_11 = arith.constant 0 : index
    %c0_12 = arith.constant 0 : index
    %10 = vector.load %arg5[%c0_10, %c0_11, %c0_12] : memref<1x32x128xi8, #tpu.memory_space<vmem>>, vector<1x32x128xi8>
    %11 = vector.shape_cast %10 : vector<1x32x128xi8> to vector<32x128xi8>
    %12 = arith.sitofp %11 : vector<32x128xi8> to vector<32x128xf32>
    %c0_13 = arith.constant 0 : index
    %c0_14 = arith.constant 0 : index
    %c0_15 = arith.constant 0 : index
    %13 = vector.load %arg3[%c0_13, %c0_14, %c0_15] : memref<1x32x128xi8, #tpu.memory_space<vmem>>, vector<1x32x128xi8>
    %14 = vector.shape_cast %13 : vector<1x32x128xi8> to vector<32x128xi8>
    %15 = arith.sitofp %14 : vector<32x128xi8> to vector<32x128xf32>
    %cst = arith.constant 0.000000e+00 : f32
    %16 = vector.broadcast %cst : f32 to vector<32x128xf32>
    %17 = arith.cmpf ogt, %15, %16 : vector<32x128xf32>
    %18 = arith.mulf %4, %4 : vector<32x128xf32>
    %19 = arith.mulf %6, %6 : vector<32x128xf32>
    %20 = arith.addf %18, %19 : vector<32x128xf32>
    %cst_16 = arith.constant 1.600000e+05 : f32
    %21 = vector.broadcast %cst_16 : f32 to vector<32x128xf32>
    %22 = arith.cmpf olt, %20, %21 : vector<32x128xf32>
    %23 = arith.andi %17, %22 : vector<32x128xi1>
    %24 = arith.extui %23 : vector<32x128xi1> to vector<32x128xi32>
    %25 = arith.sitofp %24 : vector<32x128xi32> to vector<32x128xf32>
    %26 = tpu.iota {dimensions = array<i32: 0>} : vector<32x128xi32>
    %27 = tpu.iota {dimensions = array<i32: 1>} : vector<32x128xi32>
    %c32_i32 = arith.constant 32 : i32
    %28 = arith.muli %arg1, %c32_i32 : i32
    %29 = vector.broadcast %28 : i32 to vector<32x128xi32>
    %30 = arith.addi %26, %29 : vector<32x128xi32>
    %c1_i32 = arith.constant 1 : i32
    %31 = vector.broadcast %c1_i32 : i32 to vector<32x128xi32>
    %32 = arith.cmpi sge, %30, %31 : vector<32x128xi32>
    %c1_i32_17 = arith.constant 1 : i32
    %33 = vector.broadcast %c1_i32_17 : i32 to vector<32x128xi32>
    %34 = arith.cmpi sge, %27, %33 : vector<32x128xi32>
    %c127_i32 = arith.constant 127 : i32
    %35 = vector.broadcast %c127_i32 : i32 to vector<32x128xi32>
    %36 = arith.cmpi slt, %27, %35 : vector<32x128xi32>
    %c0_i32_18 = arith.constant 0 : i32
    %37 = vector.broadcast %c0_i32_18 : i32 to vector<32x128xi32>
    %38 = arith.cmpi eq, %26, %37 : vector<32x128xi32>
    %39 = arith.cmpf oeq, %9, %12 : vector<32x128xf32>
    %40 = arith.andi %39, %23 : vector<32x128xi1>
    %41 = arith.extui %40 : vector<32x128xi1> to vector<32x128xi32>
    %42 = arith.sitofp %41 : vector<32x128xi32> to vector<32x128xf32>
    %c127_i32_19 = arith.constant 127 : i32
    %43 = tpu.dynamic_rotate %42 by %c127_i32_19 dim 1 : vector<32x128xf32>, i32 -> vector<32x128xf32>
    %c127_i32_20 = arith.constant 127 : i32
    %44 = tpu.dynamic_rotate %9 by %c127_i32_20 dim 1 : vector<32x128xf32>, i32 -> vector<32x128xf32>
    %c0_21 = arith.constant 0 : index
    %c0_22 = arith.constant 0 : index
    %45 = vector.load %arg10[%c0_21, %c0_22] : memref<7x128xf32, #tpu.memory_space<vmem>>, vector<1x128xf32>
    %c1_i32_23 = arith.constant 1 : i32
    %46 = tpu.dynamic_rotate %9 by %c1_i32_23 dim 0 : vector<32x128xf32>, i32 -> vector<32x128xf32>
    %47 = vector.shape_cast %45 : vector<1x128xf32> to vector<1x128xf32>
    %48 = vector.broadcast %47 : vector<1x128xf32> to vector<32x128xf32>
    %49 = arith.select %38, %48, %46 : vector<32x128xi1>, vector<32x128xf32>
    %50 = arith.andi %32, %34 : vector<32x128xi1>
    %51 = arith.andi %50, %40 : vector<32x128xi1>
    %52 = arith.extui %51 : vector<32x128xi1> to vector<32x128xi32>
    %53 = arith.sitofp %52 : vector<32x128xi32> to vector<32x128xf32>
    %54 = arith.cmpf oeq, %49, %9 : vector<32x128xf32>
    %55 = arith.andi %51, %54 : vector<32x128xi1>
    %56 = arith.extui %55 : vector<32x128xi1> to vector<32x128xi32>
    %57 = arith.sitofp %56 : vector<32x128xi32> to vector<32x128xf32>
    %58 = arith.andi %32, %36 : vector<32x128xi1>
    %59 = arith.cmpf oeq, %9, %44 : vector<32x128xf32>
    %60 = arith.andi %58, %59 : vector<32x128xi1>
    %61 = arith.extui %60 : vector<32x128xi1> to vector<32x128xi32>
    %62 = arith.sitofp %61 : vector<32x128xi32> to vector<32x128xf32>
    %63 = arith.mulf %62, %43 : vector<32x128xf32>
    %c0_24 = arith.constant 0 : index
    %c6 = arith.constant 6 : index
    %c0_25 = arith.constant 0 : index
    %c0_26 = arith.constant 0 : index
    %64 = vector.load %arg9[%c0_24, %c6, %c0_25, %c0_26] : memref<1x12x8x128xf32, #tpu.memory_space<vmem>>, vector<1x1x8x128xf32>
    %65 = vector.shape_cast %64 : vector<1x1x8x128xf32> to vector<8x128xf32>
    %66 = vector.extract_strided_slice %25 {offsets = [0, 0], sizes = [8, 128], strides = [1, 1]} : vector<32x128xf32> to vector<8x128xf32>
    %67 = vector.extract_strided_slice %25 {offsets = [8, 0], sizes = [8, 128], strides = [1, 1]} : vector<32x128xf32> to vector<8x128xf32>
    %68 = arith.addf %66, %67 : vector<8x128xf32>
    %69 = vector.extract_strided_slice %25 {offsets = [16, 0], sizes = [8, 128], strides = [1, 1]} : vector<32x128xf32> to vector<8x128xf32>
    %70 = arith.addf %68, %69 : vector<8x128xf32>
    %71 = vector.extract_strided_slice %25 {offsets = [24, 0], sizes = [8, 128], strides = [1, 1]} : vector<32x128xf32> to vector<8x128xf32>
    %72 = arith.addf %70, %71 : vector<8x128xf32>
    %73 = arith.addf %65, %72 : vector<8x128xf32>
    %c0_27 = arith.constant 0 : index
    %c6_28 = arith.constant 6 : index
    %c0_29 = arith.constant 0 : index
    %c0_30 = arith.constant 0 : index
    %74 = vector.load %arg9[%c0_27, %c6_28, %c0_29, %c0_30] : memref<1x12x8x128xf32, #tpu.memory_space<vmem>>, vector<1x1x8x128xf32>
    %75 = vector.shape_cast %74 : vector<1x1x8x128xf32> to vector<8x128xf32>
    %76 = vector.shape_cast %73 : vector<8x128xf32> to vector<1x1x8x128xf32>
    tpu.vector_store %arg9[%c0_27, %c6_28, %c0_29, %c0_30], %76 {strides = array<i32>} : memref<1x12x8x128xf32, #tpu.memory_space<vmem>>, vector<1x1x8x128xf32>,
    %c0_31 = arith.constant 0 : index
    %c7 = arith.constant 7 : index
    %c0_32 = arith.constant 0 : index
    %c0_33 = arith.constant 0 : index
    %77 = vector.load %arg9[%c0_31, %c7, %c0_32, %c0_33] : memref<1x12x8x128xf32, #tpu.memory_space<vmem>>, vector<1x1x8x128xf32>
    %78 = vector.shape_cast %77 : vector<1x1x8x128xf32> to vector<8x128xf32>
    %79 = vector.extract_strided_slice %53 {offsets = [0, 0], sizes = [8, 128], strides = [1, 1]} : vector<32x128xf32> to vector<8x128xf32>
    %80 = vector.extract_strided_slice %53 {offsets = [8, 0], sizes = [8, 128], strides = [1, 1]} : vector<32x128xf32> to vector<8x128xf32>
    %81 = arith.addf %79, %80 : vector<8x128xf32>
    %82 = vector.extract_strided_slice %53 {offsets = [16, 0], sizes = [8, 128], strides = [1, 1]} : vector<32x128xf32> to vector<8x128xf32>
    %83 = arith.addf %81, %82 : vector<8x128xf32>
    %84 = vector.extract_strided_slice %53 {offsets = [24, 0], sizes = [8, 128], strides = [1, 1]} : vector<32x128xf32> to vector<8x128xf32>
    %85 = arith.addf %83, %84 : vector<8x128xf32>
    %86 = arith.addf %78, %85 : vector<8x128xf32>
    %c0_34 = arith.constant 0 : index
    %c7_35 = arith.constant 7 : index
    %c0_36 = arith.constant 0 : index
    %c0_37 = arith.constant 0 : index
    %87 = vector.load %arg9[%c0_34, %c7_35, %c0_36, %c0_37] : memref<1x12x8x128xf32, #tpu.memory_space<vmem>>, vector<1x1x8x128xf32>
    %88 = vector.shape_cast %87 : vector<1x1x8x128xf32> to vector<8x128xf32>
    %89 = vector.shape_cast %86 : vector<8x128xf32> to vector<1x1x8x128xf32>
    tpu.vector_store %arg9[%c0_34, %c7_35, %c0_36, %c0_37], %89 {strides = array<i32>} : memref<1x12x8x128xf32, #tpu.memory_space<vmem>>, vector<1x1x8x128xf32>,
    %90 = vector.extract_strided_slice %9 {offsets = [31, 0], sizes = [1, 128], strides = [1, 1]} : vector<32x128xf32> to vector<1x128xf32>
    %c0_38 = arith.constant 0 : index
    %c0_39 = arith.constant 0 : index
    %91 = vector.load %arg10[%c0_38, %c0_39] : memref<7x128xf32, #tpu.memory_space<vmem>>, vector<1x128xf32>
    tpu.vector_store %arg10[%c0_38, %c0_39], %90 {strides = array<i32>} : memref<7x128xf32, #tpu.memory_space<vmem>>, vector<1x128xf32>,
    %c0_40 = arith.constant 0 : index
    %c0_41 = arith.constant 0 : index
    %c0_42 = arith.constant 0 : index
    %c0_43 = arith.constant 0 : index
    %92 = vector.load %arg6[%c0_40, %c0_41, %c0_42, %c0_43] : memref<1x2x32x128xf32, #tpu.memory_space<vmem>>, vector<1x1x32x128xf32>
    %93 = vector.shape_cast %92 : vector<1x1x32x128xf32> to vector<32x128xf32>
    %c0_44 = arith.constant 0 : index
    %c1_45 = arith.constant 1 : index
    %c0_46 = arith.constant 0 : index
    %c0_47 = arith.constant 0 : index
    %94 = vector.load %arg6[%c0_44, %c1_45, %c0_46, %c0_47] : memref<1x2x32x128xf32, #tpu.memory_space<vmem>>, vector<1x1x32x128xf32>
    %95 = vector.shape_cast %94 : vector<1x1x32x128xf32> to vector<32x128xf32>
    %96 = arith.subf %93, %4 : vector<32x128xf32>
    %97 = arith.subf %95, %6 : vector<32x128xf32>
    %98 = math.absf %96 : vector<32x128xf32>
    %99 = math.absf %97 : vector<32x128xf32>
    %100 = arith.addf %98, %99 : vector<32x128xf32>
    %101 = arith.mulf %100, %25 : vector<32x128xf32>
    %c0_48 = arith.constant 0 : index
    %c0_49 = arith.constant 0 : index
    %c0_50 = arith.constant 0 : index
    %c0_51 = arith.constant 0 : index
    %102 = vector.load %arg9[%c0_48, %c0_49, %c0_50, %c0_51] : memref<1x12x8x128xf32, #tpu.memory_space<vmem>>, vector<1x1x8x128xf32>
    %103 = vector.shape_cast %102 : vector<1x1x8x128xf32> to vector<8x128xf32>
    %104 = vector.extract_strided_slice %101 {offsets = [0, 0], sizes = [8, 128], strides = [1, 1]} : vector<32x128xf32> to vector<8x128xf32>
    %105 = vector.extract_strided_slice %101 {offsets = [8, 0], sizes = [8, 128], strides = [1, 1]} : vector<32x128xf32> to vector<8x128xf32>
    %106 = arith.addf %104, %105 : vector<8x128xf32>
    %107 = vector.extract_strided_slice %101 {offsets = [16, 0], sizes = [8, 128], strides = [1, 1]} : vector<32x128xf32> to vector<8x128xf32>
    %108 = arith.addf %106, %107 : vector<8x128xf32>
    %109 = vector.extract_strided_slice %101 {offsets = [24, 0], sizes = [8, 128], strides = [1, 1]} : vector<32x128xf32> to vector<8x128xf32>
    %110 = arith.addf %108, %109 : vector<8x128xf32>
    %111 = arith.addf %103, %110 : vector<8x128xf32>
    %c0_52 = arith.constant 0 : index
    %c0_53 = arith.constant 0 : index
    %c0_54 = arith.constant 0 : index
    %c0_55 = arith.constant 0 : index
    %112 = vector.load %arg9[%c0_52, %c0_53, %c0_54, %c0_55] : memref<1x12x8x128xf32, #tpu.memory_space<vmem>>, vector<1x1x8x128xf32>
    %113 = vector.shape_cast %112 : vector<1x1x8x128xf32> to vector<8x128xf32>
    %114 = vector.shape_cast %111 : vector<8x128xf32> to vector<1x1x8x128xf32>
    tpu.vector_store %arg9[%c0_52, %c0_53, %c0_54, %c0_55], %114 {strides = array<i32>} : memref<1x12x8x128xf32, #tpu.memory_space<vmem>>, vector<1x1x8x128xf32>,
    %c127_i32_56 = arith.constant 127 : i32
    %115 = tpu.dynamic_rotate %93 by %c127_i32_56 dim 1 : vector<32x128xf32>, i32 -> vector<32x128xf32>
    %c127_i32_57 = arith.constant 127 : i32
    %116 = tpu.dynamic_rotate %95 by %c127_i32_57 dim 1 : vector<32x128xf32>, i32 -> vector<32x128xf32>
    %c1_58 = arith.constant 1 : index
    %c0_59 = arith.constant 0 : index
    %117 = vector.load %arg10[%c1_58, %c0_59] : memref<7x128xf32, #tpu.memory_space<vmem>>, vector<1x128xf32>
    %c1_i32_60 = arith.constant 1 : i32
    %118 = tpu.dynamic_rotate %93 by %c1_i32_60 dim 0 : vector<32x128xf32>, i32 -> vector<32x128xf32>
    %119 = vector.shape_cast %117 : vector<1x128xf32> to vector<1x128xf32>
    %120 = vector.broadcast %119 : vector<1x128xf32> to vector<32x128xf32>
    %121 = arith.select %38, %120, %118 : vector<32x128xi1>, vector<32x128xf32>
    %c2 = arith.constant 2 : index
    %c0_61 = arith.constant 0 : index
    %122 = vector.load %arg10[%c2, %c0_61] : memref<7x128xf32, #tpu.memory_space<vmem>>, vector<1x128xf32>
    %c1_i32_62 = arith.constant 1 : i32
    %123 = tpu.dynamic_rotate %95 by %c1_i32_62 dim 0 : vector<32x128xf32>, i32 -> vector<32x128xf32>
    %124 = vector.shape_cast %122 : vector<1x128xf32> to vector<1x128xf32>
    %125 = vector.broadcast %124 : vector<1x128xf32> to vector<32x128xf32>
    %126 = arith.select %38, %125, %123 : vector<32x128xi1>, vector<32x128xf32>
    %127 = arith.subf %93, %115 : vector<32x128xf32>
    %128 = math.absf %127 : vector<32x128xf32>
    %129 = arith.subf %95, %116 : vector<32x128xf32>
    %130 = math.absf %129 : vector<32x128xf32>
    %131 = arith.addf %128, %130 : vector<32x128xf32>
    %132 = arith.mulf %63, %131 : vector<32x128xf32>
    %133 = arith.subf %121, %93 : vector<32x128xf32>
    %134 = math.absf %133 : vector<32x128xf32>
    %135 = arith.subf %126, %95 : vector<32x128xf32>
    %136 = math.absf %135 : vector<32x128xf32>
    %137 = arith.addf %134, %136 : vector<32x128xf32>
    %138 = arith.mulf %57, %137 : vector<32x128xf32>
    %139 = arith.addf %132, %138 : vector<32x128xf32>
    %c0_63 = arith.constant 0 : index
    %c1_64 = arith.constant 1 : index
    %c0_65 = arith.constant 0 : index
    %c0_66 = arith.constant 0 : index
    %140 = vector.load %arg9[%c0_63, %c1_64, %c0_65, %c0_66] : memref<1x12x8x128xf32, #tpu.memory_space<vmem>>, vector<1x1x8x128xf32>
    %141 = vector.shape_cast %140 : vector<1x1x8x128xf32> to vector<8x128xf32>
    %142 = vector.extract_strided_slice %139 {offsets = [0, 0], sizes = [8, 128], strides = [1, 1]} : vector<32x128xf32> to vector<8x128xf32>
    %143 = vector.extract_strided_slice %139 {offsets = [8, 0], sizes = [8, 128], strides = [1, 1]} : vector<32x128xf32> to vector<8x128xf32>
    %144 = arith.addf %142, %143 : vector<8x128xf32>
    %145 = vector.extract_strided_slice %139 {offsets = [16, 0], sizes = [8, 128], strides = [1, 1]} : vector<32x128xf32> to vector<8x128xf32>
    %146 = arith.addf %144, %145 : vector<8x128xf32>
    %147 = vector.extract_strided_slice %139 {offsets = [24, 0], sizes = [8, 128], strides = [1, 1]} : vector<32x128xf32> to vector<8x128xf32>
    %148 = arith.addf %146, %147 : vector<8x128xf32>
    %149 = arith.addf %141, %148 : vector<8x128xf32>
    %c0_67 = arith.constant 0 : index
    %c1_68 = arith.constant 1 : index
    %c0_69 = arith.constant 0 : index
    %c0_70 = arith.constant 0 : index
    %150 = vector.load %arg9[%c0_67, %c1_68, %c0_69, %c0_70] : memref<1x12x8x128xf32, #tpu.memory_space<vmem>>, vector<1x1x8x128xf32>
    %151 = vector.shape_cast %150 : vector<1x1x8x128xf32> to vector<8x128xf32>
    %152 = vector.shape_cast %149 : vector<8x128xf32> to vector<1x1x8x128xf32>
    tpu.vector_store %arg9[%c0_67, %c1_68, %c0_69, %c0_70], %152 {strides = array<i32>} : memref<1x12x8x128xf32, #tpu.memory_space<vmem>>, vector<1x1x8x128xf32>,
    %153 = vector.extract_strided_slice %93 {offsets = [31, 0], sizes = [1, 128], strides = [1, 1]} : vector<32x128xf32> to vector<1x128xf32>
    %c1_71 = arith.constant 1 : index
    %c0_72 = arith.constant 0 : index
    %154 = vector.load %arg10[%c1_71, %c0_72] : memref<7x128xf32, #tpu.memory_space<vmem>>, vector<1x128xf32>
    tpu.vector_store %arg10[%c1_71, %c0_72], %153 {strides = array<i32>} : memref<7x128xf32, #tpu.memory_space<vmem>>, vector<1x128xf32>,
    %155 = vector.extract_strided_slice %95 {offsets = [31, 0], sizes = [1, 128], strides = [1, 1]} : vector<32x128xf32> to vector<1x128xf32>
    %c2_73 = arith.constant 2 : index
    %c0_74 = arith.constant 0 : index
    %156 = vector.load %arg10[%c2_73, %c0_74] : memref<7x128xf32, #tpu.memory_space<vmem>>, vector<1x128xf32>
    tpu.vector_store %arg10[%c2_73, %c0_74], %155 {strides = array<i32>} : memref<7x128xf32, #tpu.memory_space<vmem>>, vector<1x128xf32>,
    %c0_75 = arith.constant 0 : index
    %c0_76 = arith.constant 0 : index
    %c0_77 = arith.constant 0 : index
    %c0_78 = arith.constant 0 : index
    %157 = vector.load %arg7[%c0_75, %c0_76, %c0_77, %c0_78] : memref<1x2x32x128xf32, #tpu.memory_space<vmem>>, vector<1x1x32x128xf32>
    %158 = vector.shape_cast %157 : vector<1x1x32x128xf32> to vector<32x128xf32>
    %c0_79 = arith.constant 0 : index
    %c1_80 = arith.constant 1 : index
    %c0_81 = arith.constant 0 : index
    %c0_82 = arith.constant 0 : index
    %159 = vector.load %arg7[%c0_79, %c1_80, %c0_81, %c0_82] : memref<1x2x32x128xf32, #tpu.memory_space<vmem>>, vector<1x1x32x128xf32>
    %160 = vector.shape_cast %159 : vector<1x1x32x128xf32> to vector<32x128xf32>
    %161 = arith.subf %158, %4 : vector<32x128xf32>
    %162 = arith.subf %160, %6 : vector<32x128xf32>
    %163 = math.absf %161 : vector<32x128xf32>
    %164 = math.absf %162 : vector<32x128xf32>
    %165 = arith.addf %163, %164 : vector<32x128xf32>
    %166 = arith.mulf %165, %25 : vector<32x128xf32>
    %c0_83 = arith.constant 0 : index
    %c2_84 = arith.constant 2 : index
    %c0_85 = arith.constant 0 : index
    %c0_86 = arith.constant 0 : index
    %167 = vector.load %arg9[%c0_83, %c2_84, %c0_85, %c0_86] : memref<1x12x8x128xf32, #tpu.memory_space<vmem>>, vector<1x1x8x128xf32>
    %168 = vector.shape_cast %167 : vector<1x1x8x128xf32> to vector<8x128xf32>
    %169 = vector.extract_strided_slice %166 {offsets = [0, 0], sizes = [8, 128], strides = [1, 1]} : vector<32x128xf32> to vector<8x128xf32>
    %170 = vector.extract_strided_slice %166 {offsets = [8, 0], sizes = [8, 128], strides = [1, 1]} : vector<32x128xf32> to vector<8x128xf32>
    %171 = arith.addf %169, %170 : vector<8x128xf32>
    %172 = vector.extract_strided_slice %166 {offsets = [16, 0], sizes = [8, 128], strides = [1, 1]} : vector<32x128xf32> to vector<8x128xf32>
    %173 = arith.addf %171, %172 : vector<8x128xf32>
    %174 = vector.extract_strided_slice %166 {offsets = [24, 0], sizes = [8, 128], strides = [1, 1]} : vector<32x128xf32> to vector<8x128xf32>
    %175 = arith.addf %173, %174 : vector<8x128xf32>
    %176 = arith.addf %168, %175 : vector<8x128xf32>
    %c0_87 = arith.constant 0 : index
    %c2_88 = arith.constant 2 : index
    %c0_89 = arith.constant 0 : index
    %c0_90 = arith.constant 0 : index
    %177 = vector.load %arg9[%c0_87, %c2_88, %c0_89, %c0_90] : memref<1x12x8x128xf32, #tpu.memory_space<vmem>>, vector<1x1x8x128xf32>
    %178 = vector.shape_cast %177 : vector<1x1x8x128xf32> to vector<8x128xf32>
    %179 = vector.shape_cast %176 : vector<8x128xf32> to vector<1x1x8x128xf32>
    tpu.vector_store %arg9[%c0_87, %c2_88, %c0_89, %c0_90], %179 {strides = array<i32>} : memref<1x12x8x128xf32, #tpu.memory_space<vmem>>, vector<1x1x8x128xf32>,
    %c127_i32_91 = arith.constant 127 : i32
    %180 = tpu.dynamic_rotate %158 by %c127_i32_91 dim 1 : vector<32x128xf32>, i32 -> vector<32x128xf32>
    %c127_i32_92 = arith.constant 127 : i32
    %181 = tpu.dynamic_rotate %160 by %c127_i32_92 dim 1 : vector<32x128xf32>, i32 -> vector<32x128xf32>
    %c3 = arith.constant 3 : index
    %c0_93 = arith.constant 0 : index
    %182 = vector.load %arg10[%c3, %c0_93] : memref<7x128xf32, #tpu.memory_space<vmem>>, vector<1x128xf32>
    %c1_i32_94 = arith.constant 1 : i32
    %183 = tpu.dynamic_rotate %158 by %c1_i32_94 dim 0 : vector<32x128xf32>, i32 -> vector<32x128xf32>
    %184 = vector.shape_cast %182 : vector<1x128xf32> to vector<1x128xf32>
    %185 = vector.broadcast %184 : vector<1x128xf32> to vector<32x128xf32>
    %186 = arith.select %38, %185, %183 : vector<32x128xi1>, vector<32x128xf32>
    %c4 = arith.constant 4 : index
    %c0_95 = arith.constant 0 : index
    %187 = vector.load %arg10[%c4, %c0_95] : memref<7x128xf32, #tpu.memory_space<vmem>>, vector<1x128xf32>
    %c1_i32_96 = arith.constant 1 : i32
    %188 = tpu.dynamic_rotate %160 by %c1_i32_96 dim 0 : vector<32x128xf32>, i32 -> vector<32x128xf32>
    %189 = vector.shape_cast %187 : vector<1x128xf32> to vector<1x128xf32>
    %190 = vector.broadcast %189 : vector<1x128xf32> to vector<32x128xf32>
    %191 = arith.select %38, %190, %188 : vector<32x128xi1>, vector<32x128xf32>
    %192 = arith.subf %158, %180 : vector<32x128xf32>
    %193 = math.absf %192 : vector<32x128xf32>
    %194 = arith.subf %160, %181 : vector<32x128xf32>
    %195 = math.absf %194 : vector<32x128xf32>
    %196 = arith.addf %193, %195 : vector<32x128xf32>
    %197 = arith.mulf %63, %196 : vector<32x128xf32>
    %198 = arith.subf %186, %158 : vector<32x128xf32>
    %199 = math.absf %198 : vector<32x128xf32>
    %200 = arith.subf %191, %160 : vector<32x128xf32>
    %201 = math.absf %200 : vector<32x128xf32>
    %202 = arith.addf %199, %201 : vector<32x128xf32>
    %203 = arith.mulf %57, %202 : vector<32x128xf32>
    %204 = arith.addf %197, %203 : vector<32x128xf32>
    %c0_97 = arith.constant 0 : index
    %c3_98 = arith.constant 3 : index
    %c0_99 = arith.constant 0 : index
    %c0_100 = arith.constant 0 : index
    %205 = vector.load %arg9[%c0_97, %c3_98, %c0_99, %c0_100] : memref<1x12x8x128xf32, #tpu.memory_space<vmem>>, vector<1x1x8x128xf32>
    %206 = vector.shape_cast %205 : vector<1x1x8x128xf32> to vector<8x128xf32>
    %207 = vector.extract_strided_slice %204 {offsets = [0, 0], sizes = [8, 128], strides = [1, 1]} : vector<32x128xf32> to vector<8x128xf32>
    %208 = vector.extract_strided_slice %204 {offsets = [8, 0], sizes = [8, 128], strides = [1, 1]} : vector<32x128xf32> to vector<8x128xf32>
    %209 = arith.addf %207, %208 : vector<8x128xf32>
    %210 = vector.extract_strided_slice %204 {offsets = [16, 0], sizes = [8, 128], strides = [1, 1]} : vector<32x128xf32> to vector<8x128xf32>
    %211 = arith.addf %209, %210 : vector<8x128xf32>
    %212 = vector.extract_strided_slice %204 {offsets = [24, 0], sizes = [8, 128], strides = [1, 1]} : vector<32x128xf32> to vector<8x128xf32>
    %213 = arith.addf %211, %212 : vector<8x128xf32>
    %214 = arith.addf %206, %213 : vector<8x128xf32>
    %c0_101 = arith.constant 0 : index
    %c3_102 = arith.constant 3 : index
    %c0_103 = arith.constant 0 : index
    %c0_104 = arith.constant 0 : index
    %215 = vector.load %arg9[%c0_101, %c3_102, %c0_103, %c0_104] : memref<1x12x8x128xf32, #tpu.memory_space<vmem>>, vector<1x1x8x128xf32>
    %216 = vector.shape_cast %215 : vector<1x1x8x128xf32> to vector<8x128xf32>
    %217 = vector.shape_cast %214 : vector<8x128xf32> to vector<1x1x8x128xf32>
    tpu.vector_store %arg9[%c0_101, %c3_102, %c0_103, %c0_104], %217 {strides = array<i32>} : memref<1x12x8x128xf32, #tpu.memory_space<vmem>>, vector<1x1x8x128xf32>,
    %218 = vector.extract_strided_slice %158 {offsets = [31, 0], sizes = [1, 128], strides = [1, 1]} : vector<32x128xf32> to vector<1x128xf32>
    %c3_105 = arith.constant 3 : index
    %c0_106 = arith.constant 0 : index
    %219 = vector.load %arg10[%c3_105, %c0_106] : memref<7x128xf32, #tpu.memory_space<vmem>>, vector<1x128xf32>
    tpu.vector_store %arg10[%c3_105, %c0_106], %218 {strides = array<i32>} : memref<7x128xf32, #tpu.memory_space<vmem>>, vector<1x128xf32>,
    %220 = vector.extract_strided_slice %160 {offsets = [31, 0], sizes = [1, 128], strides = [1, 1]} : vector<32x128xf32> to vector<1x128xf32>
    %c4_107 = arith.constant 4 : index
    %c0_108 = arith.constant 0 : index
    %221 = vector.load %arg10[%c4_107, %c0_108] : memref<7x128xf32, #tpu.memory_space<vmem>>, vector<1x128xf32>
    tpu.vector_store %arg10[%c4_107, %c0_108], %220 {strides = array<i32>} : memref<7x128xf32, #tpu.memory_space<vmem>>, vector<1x128xf32>,
    %c0_109 = arith.constant 0 : index
    %c0_110 = arith.constant 0 : index
    %c0_111 = arith.constant 0 : index
    %c0_112 = arith.constant 0 : index
    %222 = vector.load %arg8[%c0_109, %c0_110, %c0_111, %c0_112] : memref<1x2x32x128xf32, #tpu.memory_space<vmem>>, vector<1x1x32x128xf32>
    %223 = vector.shape_cast %222 : vector<1x1x32x128xf32> to vector<32x128xf32>
    %c0_113 = arith.constant 0 : index
    %c1_114 = arith.constant 1 : index
    %c0_115 = arith.constant 0 : index
    %c0_116 = arith.constant 0 : index
    %224 = vector.load %arg8[%c0_113, %c1_114, %c0_115, %c0_116] : memref<1x2x32x128xf32, #tpu.memory_space<vmem>>, vector<1x1x32x128xf32>
    %225 = vector.shape_cast %224 : vector<1x1x32x128xf32> to vector<32x128xf32>
    %226 = arith.subf %223, %4 : vector<32x128xf32>
    %227 = arith.subf %225, %6 : vector<32x128xf32>
    %228 = math.absf %226 : vector<32x128xf32>
    %229 = math.absf %227 : vector<32x128xf32>
    %230 = arith.addf %228, %229 : vector<32x128xf32>
    %231 = arith.mulf %230, %25 : vector<32x128xf32>
    %c0_117 = arith.constant 0 : index
    %c4_118 = arith.constant 4 : index
    %c0_119 = arith.constant 0 : index
    %c0_120 = arith.constant 0 : index
    %232 = vector.load %arg9[%c0_117, %c4_118, %c0_119, %c0_120] : memref<1x12x8x128xf32, #tpu.memory_space<vmem>>, vector<1x1x8x128xf32>
    %233 = vector.shape_cast %232 : vector<1x1x8x128xf32> to vector<8x128xf32>
    %234 = vector.extract_strided_slice %231 {offsets = [0, 0], sizes = [8, 128], strides = [1, 1]} : vector<32x128xf32> to vector<8x128xf32>
    %235 = vector.extract_strided_slice %231 {offsets = [8, 0], sizes = [8, 128], strides = [1, 1]} : vector<32x128xf32> to vector<8x128xf32>
    %236 = arith.addf %234, %235 : vector<8x128xf32>
    %237 = vector.extract_strided_slice %231 {offsets = [16, 0], sizes = [8, 128], strides = [1, 1]} : vector<32x128xf32> to vector<8x128xf32>
    %238 = arith.addf %236, %237 : vector<8x128xf32>
    %239 = vector.extract_strided_slice %231 {offsets = [24, 0], sizes = [8, 128], strides = [1, 1]} : vector<32x128xf32> to vector<8x128xf32>
    %240 = arith.addf %238, %239 : vector<8x128xf32>
    %241 = arith.addf %233, %240 : vector<8x128xf32>
    %c0_121 = arith.constant 0 : index
    %c4_122 = arith.constant 4 : index
    %c0_123 = arith.constant 0 : index
    %c0_124 = arith.constant 0 : index
    %242 = vector.load %arg9[%c0_121, %c4_122, %c0_123, %c0_124] : memref<1x12x8x128xf32, #tpu.memory_space<vmem>>, vector<1x1x8x128xf32>
    %243 = vector.shape_cast %242 : vector<1x1x8x128xf32> to vector<8x128xf32>
    %244 = vector.shape_cast %241 : vector<8x128xf32> to vector<1x1x8x128xf32>
    tpu.vector_store %arg9[%c0_121, %c4_122, %c0_123, %c0_124], %244 {strides = array<i32>} : memref<1x12x8x128xf32, #tpu.memory_space<vmem>>, vector<1x1x8x128xf32>,
    %c127_i32_125 = arith.constant 127 : i32
    %245 = tpu.dynamic_rotate %223 by %c127_i32_125 dim 1 : vector<32x128xf32>, i32 -> vector<32x128xf32>
    %c127_i32_126 = arith.constant 127 : i32
    %246 = tpu.dynamic_rotate %225 by %c127_i32_126 dim 1 : vector<32x128xf32>, i32 -> vector<32x128xf32>
    %c5 = arith.constant 5 : index
    %c0_127 = arith.constant 0 : index
    %247 = vector.load %arg10[%c5, %c0_127] : memref<7x128xf32, #tpu.memory_space<vmem>>, vector<1x128xf32>
    %c1_i32_128 = arith.constant 1 : i32
    %248 = tpu.dynamic_rotate %223 by %c1_i32_128 dim 0 : vector<32x128xf32>, i32 -> vector<32x128xf32>
    %249 = vector.shape_cast %247 : vector<1x128xf32> to vector<1x128xf32>
    %250 = vector.broadcast %249 : vector<1x128xf32> to vector<32x128xf32>
    %251 = arith.select %38, %250, %248 : vector<32x128xi1>, vector<32x128xf32>
    %c6_129 = arith.constant 6 : index
    %c0_130 = arith.constant 0 : index
    %252 = vector.load %arg10[%c6_129, %c0_130] : memref<7x128xf32, #tpu.memory_space<vmem>>, vector<1x128xf32>
    %c1_i32_131 = arith.constant 1 : i32
    %253 = tpu.dynamic_rotate %225 by %c1_i32_131 dim 0 : vector<32x128xf32>, i32 -> vector<32x128xf32>
    %254 = vector.shape_cast %252 : vector<1x128xf32> to vector<1x128xf32>
    %255 = vector.broadcast %254 : vector<1x128xf32> to vector<32x128xf32>
    %256 = arith.select %38, %255, %253 : vector<32x128xi1>, vector<32x128xf32>
    %257 = arith.subf %223, %245 : vector<32x128xf32>
    %258 = math.absf %257 : vector<32x128xf32>
    %259 = arith.subf %225, %246 : vector<32x128xf32>
    %260 = math.absf %259 : vector<32x128xf32>
    %261 = arith.addf %258, %260 : vector<32x128xf32>
    %262 = arith.mulf %63, %261 : vector<32x128xf32>
    %263 = arith.subf %251, %223 : vector<32x128xf32>
    %264 = math.absf %263 : vector<32x128xf32>
    %265 = arith.subf %256, %225 : vector<32x128xf32>
    %266 = math.absf %265 : vector<32x128xf32>
    %267 = arith.addf %264, %266 : vector<32x128xf32>
    %268 = arith.mulf %57, %267 : vector<32x128xf32>
    %269 = arith.addf %262, %268 : vector<32x128xf32>
    %c0_132 = arith.constant 0 : index
    %c5_133 = arith.constant 5 : index
    %c0_134 = arith.constant 0 : index
    %c0_135 = arith.constant 0 : index
    %270 = vector.load %arg9[%c0_132, %c5_133, %c0_134, %c0_135] : memref<1x12x8x128xf32, #tpu.memory_space<vmem>>, vector<1x1x8x128xf32>
    %271 = vector.shape_cast %270 : vector<1x1x8x128xf32> to vector<8x128xf32>
    %272 = vector.extract_strided_slice %269 {offsets = [0, 0], sizes = [8, 128], strides = [1, 1]} : vector<32x128xf32> to vector<8x128xf32>
    %273 = vector.extract_strided_slice %269 {offsets = [8, 0], sizes = [8, 128], strides = [1, 1]} : vector<32x128xf32> to vector<8x128xf32>
    %274 = arith.addf %272, %273 : vector<8x128xf32>
    %275 = vector.extract_strided_slice %269 {offsets = [16, 0], sizes = [8, 128], strides = [1, 1]} : vector<32x128xf32> to vector<8x128xf32>
    %276 = arith.addf %274, %275 : vector<8x128xf32>
    %277 = vector.extract_strided_slice %269 {offsets = [24, 0], sizes = [8, 128], strides = [1, 1]} : vector<32x128xf32> to vector<8x128xf32>
    %278 = arith.addf %276, %277 : vector<8x128xf32>
    %279 = arith.addf %271, %278 : vector<8x128xf32>
    %c0_136 = arith.constant 0 : index
    %c5_137 = arith.constant 5 : index
    %c0_138 = arith.constant 0 : index
    %c0_139 = arith.constant 0 : index
    %280 = vector.load %arg9[%c0_136, %c5_137, %c0_138, %c0_139] : memref<1x12x8x128xf32, #tpu.memory_space<vmem>>, vector<1x1x8x128xf32>
    %281 = vector.shape_cast %280 : vector<1x1x8x128xf32> to vector<8x128xf32>
    %282 = vector.shape_cast %279 : vector<8x128xf32> to vector<1x1x8x128xf32>
    tpu.vector_store %arg9[%c0_136, %c5_137, %c0_138, %c0_139], %282 {strides = array<i32>} : memref<1x12x8x128xf32, #tpu.memory_space<vmem>>, vector<1x1x8x128xf32>,
    %283 = vector.extract_strided_slice %223 {offsets = [31, 0], sizes = [1, 128], strides = [1, 1]} : vector<32x128xf32> to vector<1x128xf32>
    %c5_140 = arith.constant 5 : index
    %c0_141 = arith.constant 0 : index
    %284 = vector.load %arg10[%c5_140, %c0_141] : memref<7x128xf32, #tpu.memory_space<vmem>>, vector<1x128xf32>
    tpu.vector_store %arg10[%c5_140, %c0_141], %283 {strides = array<i32>} : memref<7x128xf32, #tpu.memory_space<vmem>>, vector<1x128xf32>,
    %285 = vector.extract_strided_slice %225 {offsets = [31, 0], sizes = [1, 128], strides = [1, 1]} : vector<32x128xf32> to vector<1x128xf32>
    %c6_142 = arith.constant 6 : index
    %c0_143 = arith.constant 0 : index
    %286 = vector.load %arg10[%c6_142, %c0_143] : memref<7x128xf32, #tpu.memory_space<vmem>>, vector<1x128xf32>
    tpu.vector_store %arg10[%c6_142, %c0_143], %285 {strides = array<i32>} : memref<7x128xf32, #tpu.memory_space<vmem>>, vector<1x128xf32>,
    %287 = arith.mulf %226, %226 : vector<32x128xf32>
    %288 = arith.mulf %227, %227 : vector<32x128xf32>
    %289 = arith.addf %287, %288 : vector<32x128xf32>
    %290 = math.sqrt %289 : vector<32x128xf32>
    %291 = arith.mulf %290, %25 : vector<32x128xf32>
    %c0_144 = arith.constant 0 : index
    %c8 = arith.constant 8 : index
    %c0_145 = arith.constant 0 : index
    %c0_146 = arith.constant 0 : index
    %292 = vector.load %arg9[%c0_144, %c8, %c0_145, %c0_146] : memref<1x12x8x128xf32, #tpu.memory_space<vmem>>, vector<1x1x8x128xf32>
    %293 = vector.shape_cast %292 : vector<1x1x8x128xf32> to vector<8x128xf32>
    %294 = vector.extract_strided_slice %291 {offsets = [0, 0], sizes = [8, 128], strides = [1, 1]} : vector<32x128xf32> to vector<8x128xf32>
    %295 = vector.extract_strided_slice %291 {offsets = [8, 0], sizes = [8, 128], strides = [1, 1]} : vector<32x128xf32> to vector<8x128xf32>
    %296 = arith.addf %294, %295 : vector<8x128xf32>
    %297 = vector.extract_strided_slice %291 {offsets = [16, 0], sizes = [8, 128], strides = [1, 1]} : vector<32x128xf32> to vector<8x128xf32>
    %298 = arith.addf %296, %297 : vector<8x128xf32>
    %299 = vector.extract_strided_slice %291 {offsets = [24, 0], sizes = [8, 128], strides = [1, 1]} : vector<32x128xf32> to vector<8x128xf32>
    %300 = arith.addf %298, %299 : vector<8x128xf32>
    %301 = arith.addf %293, %300 : vector<8x128xf32>
    %c0_147 = arith.constant 0 : index
    %c8_148 = arith.constant 8 : index
    %c0_149 = arith.constant 0 : index
    %c0_150 = arith.constant 0 : index
    %302 = vector.load %arg9[%c0_147, %c8_148, %c0_149, %c0_150] : memref<1x12x8x128xf32, #tpu.memory_space<vmem>>, vector<1x1x8x128xf32>
    %303 = vector.shape_cast %302 : vector<1x1x8x128xf32> to vector<8x128xf32>
    %304 = vector.shape_cast %301 : vector<8x128xf32> to vector<1x1x8x128xf32>
    tpu.vector_store %arg9[%c0_147, %c8_148, %c0_149, %c0_150], %304 {strides = array<i32>} : memref<1x12x8x128xf32, #tpu.memory_space<vmem>>, vector<1x1x8x128xf32>,
    %cst_151 = arith.constant 1.000000e+00 : f32
    %305 = vector.broadcast %cst_151 : f32 to vector<32x128xf32>
    %306 = arith.cmpf olt, %289, %305 : vector<32x128xf32>
    %307 = arith.andi %23, %306 : vector<32x128xi1>
    %308 = arith.extui %307 : vector<32x128xi1> to vector<32x128xi32>
    %309 = arith.sitofp %308 : vector<32x128xi32> to vector<32x128xf32>
    %c0_152 = arith.constant 0 : index
    %c9 = arith.constant 9 : index
    %c0_153 = arith.constant 0 : index
    %c0_154 = arith.constant 0 : index
    %310 = vector.load %arg9[%c0_152, %c9, %c0_153, %c0_154] : memref<1x12x8x128xf32, #tpu.memory_space<vmem>>, vector<1x1x8x128xf32>
    %311 = vector.shape_cast %310 : vector<1x1x8x128xf32> to vector<8x128xf32>
    %312 = vector.extract_strided_slice %309 {offsets = [0, 0], sizes = [8, 128], strides = [1, 1]} : vector<32x128xf32> to vector<8x128xf32>
    %313 = vector.extract_strided_slice %309 {offsets = [8, 0], sizes = [8, 128], strides = [1, 1]} : vector<32x128xf32> to vector<8x128xf32>
    %314 = arith.addf %312, %313 : vector<8x128xf32>
    %315 = vector.extract_strided_slice %309 {offsets = [16, 0], sizes = [8, 128], strides = [1, 1]} : vector<32x128xf32> to vector<8x128xf32>
    %316 = arith.addf %314, %315 : vector<8x128xf32>
    %317 = vector.extract_strided_slice %309 {offsets = [24, 0], sizes = [8, 128], strides = [1, 1]} : vector<32x128xf32> to vector<8x128xf32>
    %318 = arith.addf %316, %317 : vector<8x128xf32>
    %319 = arith.addf %311, %318 : vector<8x128xf32>
    %c0_155 = arith.constant 0 : index
    %c9_156 = arith.constant 9 : index
    %c0_157 = arith.constant 0 : index
    %c0_158 = arith.constant 0 : index
    %320 = vector.load %arg9[%c0_155, %c9_156, %c0_157, %c0_158] : memref<1x12x8x128xf32, #tpu.memory_space<vmem>>, vector<1x1x8x128xf32>
    %321 = vector.shape_cast %320 : vector<1x1x8x128xf32> to vector<8x128xf32>
    %322 = vector.shape_cast %319 : vector<8x128xf32> to vector<1x1x8x128xf32>
    tpu.vector_store %arg9[%c0_155, %c9_156, %c0_157, %c0_158], %322 {strides = array<i32>} : memref<1x12x8x128xf32, #tpu.memory_space<vmem>>, vector<1x1x8x128xf32>,
    %cst_159 = arith.constant 9.000000e+00 : f32
    %323 = vector.broadcast %cst_159 : f32 to vector<32x128xf32>
    %324 = arith.cmpf olt, %289, %323 : vector<32x128xf32>
    %325 = arith.andi %23, %324 : vector<32x128xi1>
    %326 = arith.extui %325 : vector<32x128xi1> to vector<32x128xi32>
    %327 = arith.sitofp %326 : vector<32x128xi32> to vector<32x128xf32>
    %c0_160 = arith.constant 0 : index
    %c10 = arith.constant 10 : index
    %c0_161 = arith.constant 0 : index
    %c0_162 = arith.constant 0 : index
    %328 = vector.load %arg9[%c0_160, %c10, %c0_161, %c0_162] : memref<1x12x8x128xf32, #tpu.memory_space<vmem>>, vector<1x1x8x128xf32>
    %329 = vector.shape_cast %328 : vector<1x1x8x128xf32> to vector<8x128xf32>
    %330 = vector.extract_strided_slice %327 {offsets = [0, 0], sizes = [8, 128], strides = [1, 1]} : vector<32x128xf32> to vector<8x128xf32>
    %331 = vector.extract_strided_slice %327 {offsets = [8, 0], sizes = [8, 128], strides = [1, 1]} : vector<32x128xf32> to vector<8x128xf32>
    %332 = arith.addf %330, %331 : vector<8x128xf32>
    %333 = vector.extract_strided_slice %327 {offsets = [16, 0], sizes = [8, 128], strides = [1, 1]} : vector<32x128xf32> to vector<8x128xf32>
    %334 = arith.addf %332, %333 : vector<8x128xf32>
    %335 = vector.extract_strided_slice %327 {offsets = [24, 0], sizes = [8, 128], strides = [1, 1]} : vector<32x128xf32> to vector<8x128xf32>
    %336 = arith.addf %334, %335 : vector<8x128xf32>
    %337 = arith.addf %329, %336 : vector<8x128xf32>
    %c0_163 = arith.constant 0 : index
    %c10_164 = arith.constant 10 : index
    %c0_165 = arith.constant 0 : index
    %c0_166 = arith.constant 0 : index
    %338 = vector.load %arg9[%c0_163, %c10_164, %c0_165, %c0_166] : memref<1x12x8x128xf32, #tpu.memory_space<vmem>>, vector<1x1x8x128xf32>
    %339 = vector.shape_cast %338 : vector<1x1x8x128xf32> to vector<8x128xf32>
    %340 = vector.shape_cast %337 : vector<8x128xf32> to vector<1x1x8x128xf32>
    tpu.vector_store %arg9[%c0_163, %c10_164, %c0_165, %c0_166], %340 {strides = array<i32>} : memref<1x12x8x128xf32, #tpu.memory_space<vmem>>, vector<1x1x8x128xf32>,
    %cst_167 = arith.constant 2.500000e+01 : f32
    %341 = vector.broadcast %cst_167 : f32 to vector<32x128xf32>
    %342 = arith.cmpf olt, %289, %341 : vector<32x128xf32>
    %343 = arith.andi %23, %342 : vector<32x128xi1>
    %344 = arith.extui %343 : vector<32x128xi1> to vector<32x128xi32>
    %345 = arith.sitofp %344 : vector<32x128xi32> to vector<32x128xf32>
    %c0_168 = arith.constant 0 : index
    %c11 = arith.constant 11 : index
    %c0_169 = arith.constant 0 : index
    %c0_170 = arith.constant 0 : index
    %346 = vector.load %arg9[%c0_168, %c11, %c0_169, %c0_170] : memref<1x12x8x128xf32, #tpu.memory_space<vmem>>, vector<1x1x8x128xf32>
    %347 = vector.shape_cast %346 : vector<1x1x8x128xf32> to vector<8x128xf32>
    %348 = vector.extract_strided_slice %345 {offsets = [0, 0], sizes = [8, 128], strides = [1, 1]} : vector<32x128xf32> to vector<8x128xf32>
    %349 = vector.extract_strided_slice %345 {offsets = [8, 0], sizes = [8, 128], strides = [1, 1]} : vector<32x128xf32> to vector<8x128xf32>
    %350 = arith.addf %348, %349 : vector<8x128xf32>
    %351 = vector.extract_strided_slice %345 {offsets = [16, 0], sizes = [8, 128], strides = [1, 1]} : vector<32x128xf32> to vector<8x128xf32>
    %352 = arith.addf %350, %351 : vector<8x128xf32>
    %353 = vector.extract_strided_slice %345 {offsets = [24, 0], sizes = [8, 128], strides = [1, 1]} : vector<32x128xf32> to vector<8x128xf32>
    %354 = arith.addf %352, %353 : vector<8x128xf32>
    %355 = arith.addf %347, %354 : vector<8x128xf32>
    %c0_171 = arith.constant 0 : index
    %c11_172 = arith.constant 11 : index
    %c0_173 = arith.constant 0 : index
    %c0_174 = arith.constant 0 : index
    %356 = vector.load %arg9[%c0_171, %c11_172, %c0_173, %c0_174] : memref<1x12x8x128xf32, #tpu.memory_space<vmem>>, vector<1x1x8x128xf32>
    %357 = vector.shape_cast %356 : vector<1x1x8x128xf32> to vector<8x128xf32>
    %358 = vector.shape_cast %355 : vector<8x128xf32> to vector<1x1x8x128xf32>
    tpu.vector_store %arg9[%c0_171, %c11_172, %c0_173, %c0_174], %358 {strides = array<i32>} : memref<1x12x8x128xf32, #tpu.memory_space<vmem>>, vector<1x1x8x128xf32>,
    return
  }
  func.func @transform_0(%arg0: i32, %arg1: i32) -> (i32, i32, i32, i32) {
    %c0_i32 = arith.constant 0 : i32
    %c0_i32_0 = arith.constant 0 : i32
    %c0_i32_1 = arith.constant 0 : i32
    return %arg0, %c0_i32, %arg1, %c0_i32_0 : i32, i32, i32, i32
  }
  func.func @transform_1(%arg0: i32, %arg1: i32) -> (i32, i32, i32) {
    %c0_i32 = arith.constant 0 : i32
    %c0_i32_0 = arith.constant 0 : i32
    return %arg0, %arg1, %c0_i32 : i32, i32, i32
  }
  func.func @transform_2(%arg0: i32, %arg1: i32) -> (i32, i32, i32) {
    %c0_i32 = arith.constant 0 : i32
    %c0_i32_0 = arith.constant 0 : i32
    return %arg0, %arg1, %c0_i32 : i32, i32, i32
  }
  func.func @transform_3(%arg0: i32, %arg1: i32) -> (i32, i32, i32) {
    %c0_i32 = arith.constant 0 : i32
    %c0_i32_0 = arith.constant 0 : i32
    return %arg0, %arg1, %c0_i32 : i32, i32, i32
  }
  func.func @transform_4(%arg0: i32, %arg1: i32) -> (i32, i32, i32, i32) {
    %c0_i32 = arith.constant 0 : i32
    %c0_i32_0 = arith.constant 0 : i32
    %c0_i32_1 = arith.constant 0 : i32
    return %arg0, %c0_i32, %arg1, %c0_i32_0 : i32, i32, i32, i32
  }
  func.func @transform_5(%arg0: i32, %arg1: i32) -> (i32, i32, i32, i32) {
    %c0_i32 = arith.constant 0 : i32
    %c0_i32_0 = arith.constant 0 : i32
    %c0_i32_1 = arith.constant 0 : i32
    return %arg0, %c0_i32, %arg1, %c0_i32_0 : i32, i32, i32, i32
  }
  func.func @transform_6(%arg0: i32, %arg1: i32) -> (i32, i32, i32, i32) {
    %c0_i32 = arith.constant 0 : i32
    %c0_i32_0 = arith.constant 0 : i32
    %c0_i32_1 = arith.constant 0 : i32
    return %arg0, %c0_i32, %arg1, %c0_i32_0 : i32, i32, i32, i32
  }
  func.func @transform_7(%arg0: i32, %arg1: i32) -> (i32, i32, i32, i32) {
    %c0_i32 = arith.constant 0 : i32
    %c0_i32_0 = arith.constant 0 : i32
    %c0_i32_1 = arith.constant 0 : i32
    %c0_i32_2 = arith.constant 0 : i32
    return %arg0, %c0_i32, %c0_i32_0, %c0_i32_1 : i32, i32, i32, i32
  }
}

</mosaic_0001>

<llo_original>
// kernel: run.1
$region0: #{run.1}
  #allocation0 [shape = 'u32[]', space=smem, size = 0x4, offset = 0x4, fixed_abs, tag = 'smem constant byte address 0x4 - core index']
  #allocation1 [shape = 'u32[144,128]{1,0:T(1,128)}', space=vmem, size = 0x12000, scoped, tag = 'internal scratch']
  #allocation2 [shape = 'f32[7,128]{1,0:T(8,128)}', space=vmem, size = 0x1000, scoped, tag = 'scratch operand']
  #allocation9 [shape = 's32[]', space=sflag, size = 0x4, offset = 0, fixed_abs, tag = 'sflag constant byte address 0x0 - dummy sync flag']
  #allocation11 [shape = 's32[]', space=sflag, size = 0x4, offset = 0, fixed_abs, tag = 'sflag constant byte address 0x0 - dummy sync flag']
  #allocation13 [shape = 's32[]', space=sflag, size = 0x4, offset = 0, fixed_abs, tag = 'sflag constant byte address 0x0 - dummy sync flag']
  %s0 = inlined_call_operand.vmem [shape: f32[2,2,64,128], index: 0, kind: input, shape index: {}]
  %s1 = inlined_call_operand.vmem [shape: s8[2,64,128], index: 1, kind: input, shape index: {}]
  %s2 = inlined_call_operand.vmem [shape: s8[2,64,128], index: 2, kind: input, shape index: {}]
  %s3 = inlined_call_operand.vmem [shape: s8[2,64,128], index: 3, kind: input, shape index: {}]
  %s4 = inlined_call_operand.hbm [shape: f32[2,2,64,128], index: 4, kind: input, shape index: {}]
  %s5 = inlined_call_operand.hbm [shape: f32[2,2,64,128], index: 5, kind: input, shape index: {}]
  %s6 = inlined_call_operand.hbm [shape: f32[2,2,64,128], index: 6, kind: input, shape index: {}]
  %s7 = inlined_call_operand.vmem [shape: f32[2,12,8,128], index: 7, kind: output, shape index: {}]
  %s8 = sld [smem:[#allocation0]]
  $region115: #{run.1} parent=0
    _
  %s10 = ssub.s32 1, %s8
  %s11 = scalar_select 0, %s10, %s8
  $region1: #{run.1} parent=0
    #allocation3 [shape = 'u8[65536]{0}', space=vmem, size = 0x10000, scoped, tag = 'input window, operand 0']
    #allocation4 [shape = 'u8[65536]{0}', space=vmem, size = 0x10000, scoped, tag = 'input window, operand 4']
    #allocation5 [shape = 's32[2]{0}', space=sflag, size = 0x8, scoped, tag = 'scoped memory for run.1']
    #allocation6 [shape = 'u8[65536]{0}', space=vmem, size = 0x10000, scoped, tag = 'input window, operand 5']
    #allocation7 [shape = 's32[2]{0}', space=sflag, size = 0x8, scoped, tag = 'scoped memory for run.1']
    #allocation8 [shape = 'u8[65536]{0}', space=vmem, size = 0x10000, scoped, tag = 'input window, operand 6']
    %12 = vsyncpa [#allocation5], 0
    %s13 = scalar_lea.sflag [#allocation5], 1
    %14 = vsyncpa %s13, 0
    %15 = vsyncpa [#allocation7], 0
    %s16 = scalar_lea.sflag [#allocation7], 1
    %17 = vsyncpa %s16, 0
    loop: start=0, step=1, limit=6
    $region2: #{run.1} parent=1 // loop_pre_header
      _
    $region3: #{run.1} parent=1 // loop_header
      %s19 = sphi 0, %s23
      %p20 = scmp.ge.s32.totalorder %s19, 6
      %s26 = sphi 0, %s38
      %s27 = sphi 0, %s34
      %s28 = sphi 0, %s26
      %s29 = sphi 0, %s27
      %s30 = sphi 0, %s28
      %s31 = sphi 0, %s29
      %s43 = sphi 0, %s45
      %s46 = sphi 0, %s43
      %s47 = sphi 0, %s46
      %s63 = sphi 0, %s47
      %s71 = sphi 0, %s73
      %s74 = sphi 0, %s71
      %s75 = sphi 0, %s74
      %s91 = sphi 0, %s75
      %s99 = sphi 0, %s101
      %s102 = sphi 0, %s99
      %s103 = sphi 0, %s102
      %s119 = sphi 0, %s103
      %s127 = sphi 0, %s129
      %s130 = sphi 0, %s127
      %s131 = sphi 0, %s130
      %s147 = sphi 0, %s131
      %s155 = sphi 0, %s157
      %s158 = sphi 0, %s155
      %s159 = sphi 0, %s158
      %s175 = sphi 0, %s159
      %s183 = sphi 0, %s185
      %s186 = sphi 0, %s183
      %s187 = sphi 0, %s186
      %s203 = sphi 0, %s187
      %s211 = sphi 0, %s213
      %s214 = sphi 0, %s211
      %s215 = sphi 0, %s214
      %s231 = sphi 0, %s215
      %s237 = sphi 0, %s239
      %s240 = sphi 0, %s237
      %s241 = sphi 0, %s240
      %s257 = sphi 0, %s241
    $region4: #{run.1} parent=1 // loop_header_branch
      %22 = sbr.rel (%p20) target = $region8
    $region5: #{run.1} parent=1 // loop_body
      %s24 = ssub.s32 %s19, 1
      %s25 = ssub.s32 %s19, 2
      %s32 = sadd.s32 1, %s27
      %p33 = scmp.ge.s32.totalorder %s32, 2
      %s34 = scalar_select %p33, 0, %s32
      %s35 = sadd.s32 1, %s26
      %s36 = scalar_select %p33, %s35, %s26
      %p37 = scmp.ge.s32.totalorder %s36, 2
      %s38 = scalar_select %p37, 0, %s36
      %s39 = ssub.s32 %s26, %s38
      %s40 = ssub.s32 %s27, %s34
      %s41 = sor.u32 %s39, %s40
      %p42 = scmp.eq.s32.totalorder %s41, 0
      %s44 = sadd.s32 %s43, 1
      %s45 = scalar_select %p42, %s43, %s44
      %p48 = pneg %p42
      %p49 = scmp.eq.s32.totalorder %s19, 3
      %p50 = por %p48, %p49
      %p51 = scmp.ne.s32.totalorder %s43, %s46
      %p52 = scmp.eq.s32.totalorder %s19, 0
      %p53 = por %p51, %p52
      %p54 = scmp.ne.s32.totalorder %s43, %s46
      %p55 = scmp.eq.s32.totalorder %s24, 3
      %p56 = por %p54, %p55
      %p57 = scmp.ne.s32.totalorder %s46, %s47
      %p58 = scmp.eq.s32.totalorder %s24, 0
      %p59 = por %p57, %p58
      %p60 = scmp.ne.s32.totalorder %s46, %s47
      %p61 = scmp.eq.s32.totalorder %s25, 3
      %p62 = por %p60, %p61
      %p64 = scmp.ne.s32.totalorder %s47, %s63
      %p65 = scmp.eq.s32.totalorder %s25, 0
      %p66 = por %p64, %p65
      %s67 = ssub.s32 %s26, %s38
      %s68 = ssub.s32 %s27, %s34
      %s69 = sor.u32 %s67, %s68
      %p70 = scmp.eq.s32.totalorder %s69, 0
      %s72 = sadd.s32 %s71, 1
      %s73 = scalar_select %p70, %s71, %s72
      %p76 = pneg %p70
      %p77 = scmp.eq.s32.totalorder %s19, 3
      %p78 = por %p76, %p77
      %p79 = scmp.ne.s32.totalorder %s71, %s74
      %p80 = scmp.eq.s32.totalorder %s19, 0
      %p81 = por %p79, %p80
      %p82 = scmp.ne.s32.totalorder %s71, %s74
      %p83 = scmp.eq.s32.totalorder %s24, 3
      %p84 = por %p82, %p83
      %p85 = scmp.ne.s32.totalorder %s74, %s75
      %p86 = scmp.eq.s32.totalorder %s24, 0
      %p87 = por %p85, %p86
      %p88 = scmp.ne.s32.totalorder %s74, %s75
      %p89 = scmp.eq.s32.totalorder %s25, 3
      %p90 = por %p88, %p89
      %p92 = scmp.ne.s32.totalorder %s75, %s91
      %p93 = scmp.eq.s32.totalorder %s25, 0
      %p94 = por %p92, %p93
      %s95 = ssub.s32 %s26, %s38
      %s96 = ssub.s32 %s27, %s34
      %s97 = sor.u32 %s95, %s96
      %p98 = scmp.eq.s32.totalorder %s97, 0
      %s100 = sadd.s32 %s99, 1
      %s101 = scalar_select %p98, %s99, %s100
      %p104 = pneg %p98
      %p105 = scmp.eq.s32.totalorder %s19, 3
      %p106 = por %p104, %p105
      %p107 = scmp.ne.s32.totalorder %s99, %s102
      %p108 = scmp.eq.s32.totalorder %s19, 0
      %p109 = por %p107, %p108
      %p110 = scmp.ne.s32.totalorder %s99, %s102
      %p111 = scmp.eq.s32.totalorder %s24, 3
      %p112 = por %p110, %p111
      %p113 = scmp.ne.s32.totalorder %s102, %s103
      %p114 = scmp.eq.s32.totalorder %s24, 0
      %p115 = por %p113, %p114
      %p116 = scmp.ne.s32.totalorder %s102, %s103
      %p117 = scmp.eq.s32.totalorder %s25, 3
      %p118 = por %p116, %p117
      %p120 = scmp.ne.s32.totalorder %s103, %s119
      %p121 = scmp.eq.s32.totalorder %s25, 0
      %p122 = por %p120, %p121
      %s123 = ssub.s32 %s26, %s38
      %s124 = ssub.s32 %s27, %s34
      %s125 = sor.u32 %s123, %s124
      %p126 = scmp.eq.s32.totalorder %s125, 0
      %s128 = sadd.s32 %s127, 1
      %s129 = scalar_select %p126, %s127, %s128
      %p132 = pneg %p126
      %p133 = scmp.eq.s32.totalorder %s19, 3
      %p134 = por %p132, %p133
      %p135 = scmp.ne.s32.totalorder %s127, %s130
      %p136 = scmp.eq.s32.totalorder %s19, 0
      %p137 = por %p135, %p136
      %p138 = scmp.ne.s32.totalorder %s127, %s130
      %p139 = scmp.eq.s32.totalorder %s24, 3
      %p140 = por %p138, %p139
      %p141 = scmp.ne.s32.totalorder %s130, %s131
      %p142 = scmp.eq.s32.totalorder %s24, 0
      %p143 = por %p141, %p142
      %p144 = scmp.ne.s32.totalorder %s130, %s131
      %p145 = scmp.eq.s32.totalorder %s25, 3
      %p146 = por %p144, %p145
      %p148 = scmp.ne.s32.totalorder %s131, %s147
      %p149 = scmp.eq.s32.totalorder %s25, 0
      %p150 = por %p148, %p149
      %s151 = ssub.s32 %s26, %s38
      %s152 = ssub.s32 %s27, %s34
      %s153 = sor.u32 %s151, %s152
      %p154 = scmp.eq.s32.totalorder %s153, 0
      %s156 = sadd.s32 %s155, 1
      %s157 = scalar_select %p154, %s155, %s156
      %p160 = pneg %p154
      %p161 = scmp.eq.s32.totalorder %s19, 3
      %p162 = por %p160, %p161
      %p163 = scmp.ne.s32.totalorder %s155, %s158
      %p164 = scmp.eq.s32.totalorder %s19, 0
      %p165 = por %p163, %p164
      %p166 = scmp.ne.s32.totalorder %s155, %s158
      %p167 = scmp.eq.s32.totalorder %s24, 3
      %p168 = por %p166, %p167
      %p169 = scmp.ne.s32.totalorder %s158, %s159
      %p170 = scmp.eq.s32.totalorder %s24, 0
      %p171 = por %p169, %p170
      %p172 = scmp.ne.s32.totalorder %s158, %s159
      %p173 = scmp.eq.s32.totalorder %s25, 3
      %p174 = por %p172, %p173
      %p176 = scmp.ne.s32.totalorder %s159, %s175
      %p177 = scmp.eq.s32.totalorder %s25, 0
      %p178 = por %p176, %p177
      %s179 = ssub.s32 %s26, %s38
      %s180 = ssub.s32 %s27, %s34
      %s181 = sor.u32 %s179, %s180
      %p182 = scmp.eq.s32.totalorder %s181, 0
      %s184 = sadd.s32 %s183, 1
      %s185 = scalar_select %p182, %s183, %s184
      %p188 = pneg %p182
      %p189 = scmp.eq.s32.totalorder %s19, 3
      %p190 = por %p188, %p189
      %p191 = scmp.ne.s32.totalorder %s183, %s186
      %p192 = scmp.eq.s32.totalorder %s19, 0
      %p193 = por %p191, %p192
      %p194 = scmp.ne.s32.totalorder %s183, %s186
      %p195 = scmp.eq.s32.totalorder %s24, 3
      %p196 = por %p194, %p195
      %p197 = scmp.ne.s32.totalorder %s186, %s187
      %p198 = scmp.eq.s32.totalorder %s24, 0
      %p199 = por %p197, %p198
      %p200 = scmp.ne.s32.totalorder %s186, %s187
      %p201 = scmp.eq.s32.totalorder %s25, 3
      %p202 = por %p200, %p201
      %p204 = scmp.ne.s32.totalorder %s187, %s203
      %p205 = scmp.eq.s32.totalorder %s25, 0
      %p206 = por %p204, %p205
      %s207 = ssub.s32 %s26, %s38
      %s208 = ssub.s32 %s27, %s34
      %s209 = sor.u32 %s207, %s208
      %p210 = scmp.eq.s32.totalorder %s209, 0
      %s212 = sadd.s32 %s211, 1
      %s213 = scalar_select %p210, %s211, %s212
      %p216 = pneg %p210
      %p217 = scmp.eq.s32.totalorder %s19, 3
      %p218 = por %p216, %p217
      %p219 = scmp.ne.s32.totalorder %s211, %s214
      %p220 = scmp.eq.s32.totalorder %s19, 0
      %p221 = por %p219, %p220
      %p222 = scmp.ne.s32.totalorder %s211, %s214
      %p223 = scmp.eq.s32.totalorder %s24, 3
      %p224 = por %p222, %p223
      %p225 = scmp.ne.s32.totalorder %s214, %s215
      %p226 = scmp.eq.s32.totalorder %s24, 0
      %p227 = por %p225, %p226
      %p228 = scmp.ne.s32.totalorder %s214, %s215
      %p229 = scmp.eq.s32.totalorder %s25, 3
      %p230 = por %p228, %p229
      %p232 = scmp.ne.s32.totalorder %s215, %s231
      %p233 = scmp.eq.s32.totalorder %s25, 0
      %p234 = por %p232, %p233
      %s235 = ssub.s32 %s26, %s38
      %p236 = scmp.eq.s32.totalorder %s235, 0
      %s238 = sadd.s32 %s237, 1
      %s239 = scalar_select %p236, %s237, %s238
      %p242 = pneg %p236
      %p243 = scmp.eq.s32.totalorder %s19, 3
      %p244 = por %p242, %p243
      %p245 = scmp.ne.s32.totalorder %s237, %s240
      %p246 = scmp.eq.s32.totalorder %s19, 0
      %p247 = por %p245, %p246
      %p248 = scmp.ne.s32.totalorder %s237, %s240
      %p249 = scmp.eq.s32.totalorder %s24, 3
      %p250 = por %p248, %p249
      %p251 = scmp.ne.s32.totalorder %s240, %s241
      %p252 = scmp.eq.s32.totalorder %s24, 0
      %p253 = por %p251, %p252
      %p254 = scmp.ne.s32.totalorder %s240, %s241
      %p255 = scmp.eq.s32.totalorder %s25, 3
      %p256 = por %p254, %p255
      %p258 = scmp.ne.s32.totalorder %s241, %s257
      %p259 = scmp.eq.s32.totalorder %s25, 0
      %p260 = por %p258, %p259
      %p261 = scmp.le.s32.totalorder 1, %s19
      %p262 = scmp.lt.s32.totalorder %s19, 5
      %p263 = pnand %p261, %p262
      %p264 = pneg %p263
      // Predicated region
      $region9: #{run.1} parent=5 // pred_check
        _
      $region10: #{run.1} parent=5 // pred_check_branch
        %266 = sbr.rel (%p263) target = $region12
      $region11: #{run.1} parent=5 // pred_region
        %s267 = ssub.s32 %s19, 1
      $region12: #{run.1} parent=5 // pred_fallthru
        _
      %p268 = scmp.lt.s32.totalorder %s19, 4
      // Predicated region
      $region13: #{run.1} parent=5 // pred_check
        %p269 = pneg %p268
      $region14: #{run.1} parent=5 // pred_check_branch
        %271 = sbr.rel (%p269) target = $region16
      $region15: #{run.1} parent=5 // pred_region
        // Predicated region
        $region17: #{run.1} parent=15 // pred_check
          %p272 = pneg %p53
        $region18: #{run.1} parent=15 // pred_check_branch
          %274 = sbr.rel (%p272) target = $region20
        $region19: #{run.1} parent=15 // pred_region
          %s275 = sand.u32 %s43, 1
          %s276 = sand.u32 %s43, 1
          %s277 = smul.addr %s276, 64
          %s278 = scalar_lea.vmem [#allocation3], %s277
          %s279 = smul.u32 4, %s27
          %s280 = smul.addr %s26, 16
          %s281 = sadd.s32 %s279, %s280
          %s282 = smul.addr %s281, 8
          %s283 = scalar_lea.vmem %s0, %s282
          // Predicated region
          $region21: #{run.1} parent=19 // pred_check
            _
          $region22: #{run.1} parent=19 // pred_check_branch
            %285 = sbr.rel (0) target = $region24
          $region23: #{run.1} parent=19 // pred_region
            // Predicated region
            $region25: #{run.1} parent=23 // pred_check
              _
            $region26: #{run.1} parent=23 // pred_check_branch
              %287 = sbr.rel (0) target = $region28
            $region27: #{run.1} parent=23 // pred_region
              // Predicated region
              $region40: #{run.1} parent=27 // pred_check
                _
              $region41: #{run.1} parent=27 // pred_check_branch
                %316 = sbr.rel (0) target = $region43
              $region42: #{run.1} parent=27 // pred_region
                loop: start=0, step=1, limit=1
                $region44: #{run.1} parent=42 // loop_pre_header
                  _
                $region45: #{run.1} parent=42 // loop_header
                  %s318 = sphi 0, %s322
                  %p319 = scmp.ge.s32.totalorder %s318, 1
                  %s323 = sphi %s283, %s283
                  %s324 = sphi %s278, %s278
                $region46: #{run.1} parent=42 // loop_header_branch
                  %321 = sbr.rel (%p319) target = $region50
                $region47: #{run.1} parent=42 // loop_body
                  %v325 = vld [vmem:[%s323] sm:$0xff]
                  %326 = vst [vmem:[%s324] sm:$0xff] %v325
                  %v327 = vld [vmem:[%s323 + $0x8] sm:$0xff]
                  %328 = vst [vmem:[%s324 + $0x8] sm:$0xff] %v327
                  %v329 = vld [vmem:[%s323 + $0x10] sm:$0xff]
                  %330 = vst [vmem:[%s324 + $0x10] sm:$0xff] %v329
                  %v331 = vld [vmem:[%s323 + $0x18] sm:$0xff]
                  %332 = vst [vmem:[%s324 + $0x18] sm:$0xff] %v331
                  %v333 = vld [vmem:[%s323 + $0x40] sm:$0xff]
                  %334 = vst [vmem:[%s324 + $0x20] sm:$0xff] %v333
                  %v335 = vld [vmem:[%s323 + $0x48] sm:$0xff]
                  %336 = vst [vmem:[%s324 + $0x28] sm:$0xff] %v335
                  %v337 = vld [vmem:[%s323 + $0x50] sm:$0xff]
                  %338 = vst [vmem:[%s324 + $0x30] sm:$0xff] %v337
                  %v339 = vld [vmem:[%s323 + $0x58] sm:$0xff]
                  %340 = vst [vmem:[%s324 + $0x38] sm:$0xff] %v339
                $region48: #{run.1} parent=42 // loop_footer
                  %s322 = sadd.s32 1, %s318
                $region49: #{run.1} parent=42 // loop_footer_branch
                  %317 = sbr.rel target = $region45
                $region50: #{run.1} parent=42 // loop_exit
                  _
              $region43: #{run.1} parent=27 // pred_fallthru
                _
              // Predicated region
              $region51: #{run.1} parent=27 // pred_check
                _
              $region52: #{run.1} parent=27 // pred_check_branch
                %342 = sbr.rel target = $region54
              $region53: #{run.1} parent=27 // pred_region
                _
              $region54: #{run.1} parent=27 // pred_fallthru
                _
            $region28: #{run.1} parent=23 // pred_fallthru
              _
            // Predicated region
            $region29: #{run.1} parent=23 // pred_check
              _
            $region30: #{run.1} parent=23 // pred_check_branch
              %289 = sbr.rel target = $region32
            $region31: #{run.1} parent=23 // pred_region
              loop: start=0, step=1, limit=1
              $region33: #{run.1} parent=31 // loop_pre_header
                _
              $region34: #{run.1} parent=31 // loop_header
                %s292 = sphi 0, %s296
                %p293 = scmp.ge.s32.totalorder %s292, 1
                %s297 = sphi %s283, %s283
                %s298 = sphi %s278, %s278
              $region35: #{run.1} parent=31 // loop_header_branch
                %295 = sbr.rel (%p293) target = $region39
              $region36: #{run.1} parent=31 // loop_body
                %v299 = vld [vmem:[%s297] sm:$0xff]
                %300 = vst [vmem:[%s298] sm:$0xff] %v299
                %v301 = vld [vmem:[%s297 + $0x8] sm:$0xff]
                %302 = vst [vmem:[%s298 + $0x8] sm:$0xff] %v301
                %v303 = vld [vmem:[%s297 + $0x10] sm:$0xff]
                %304 = vst [vmem:[%s298 + $0x10] sm:$0xff] %v303
                %v305 = vld [vmem:[%s297 + $0x18] sm:$0xff]
                %306 = vst [vmem:[%s298 + $0x18] sm:$0xff] %v305
                %v307 = vld [vmem:[%s297 + $0x40] sm:$0xff]
                %308 = vst [vmem:[%s298 + $0x20] sm:$0xff] %v307
                %v309 = vld [vmem:[%s297 + $0x48] sm:$0xff]
                %310 = vst [vmem:[%s298 + $0x28] sm:$0xff] %v309
                %v311 = vld [vmem:[%s297 + $0x50] sm:$0xff]
                %312 = vst [vmem:[%s298 + $0x30] sm:$0xff] %v311
                %v313 = vld [vmem:[%s297 + $0x58] sm:$0xff]
                %314 = vst [vmem:[%s298 + $0x38] sm:$0xff] %v313
              $region37: #{run.1} parent=31 // loop_footer
                %s296 = sadd.s32 1, %s292
              $region38: #{run.1} parent=31 // loop_footer_branch
                %291 = sbr.rel target = $region34
              $region39: #{run.1} parent=31 // loop_exit
                _
            $region32: #{run.1} parent=23 // pred_fallthru
              _
          $region24: #{run.1} parent=19 // pred_fallthru
            _
          %343 = vnop
        $region20: #{run.1} parent=15 // pred_fallthru
          _
        // Predicated region
        $region55: #{run.1} parent=15 // pred_check
          %p344 = pneg %p81
        $region56: #{run.1} parent=15 // pred_check_branch
          %346 = sbr.rel (%p344) target = $region58
        $region57: #{run.1} parent=15 // pred_region
          %p347 = scmp.lt.s32.totalorder %s26, 1
          %s348 = scalar_select %p347, %s26, 1
          %p349 = scmp.lt.s32.totalorder %s27, 1
          %s350 = scalar_select %p349, %s27, 1
          %s351 = smul.addr %s348, 2
          %s352 = sadd.s32 %s350, %s351
          %s353 = smul.addr %s352, 8
          %s354 = scalar_lea.vmem %s1, %s353
        $region58: #{run.1} parent=15 // pred_fallthru
          _
        // Predicated region
        $region59: #{run.1} parent=15 // pred_check
          %p355 = pneg %p109
        $region60: #{run.1} parent=15 // pred_check_branch
          %357 = sbr.rel (%p355) target = $region62
        $region61: #{run.1} parent=15 // pred_region
          %p358 = scmp.lt.s32.totalorder %s26, 1
          %s359 = scalar_select %p358, %s26, 1
          %p360 = scmp.lt.s32.totalorder %s27, 1
          %s361 = scalar_select %p360, %s27, 1
          %s362 = smul.addr %s359, 2
          %s363 = sadd.s32 %s361, %s362
          %s364 = smul.addr %s363, 8
          %s365 = scalar_lea.vmem %s2, %s364
        $region62: #{run.1} parent=15 // pred_fallthru
          _
        // Predicated region
        $region63: #{run.1} parent=15 // pred_check
          %p366 = pneg %p137
        $region64: #{run.1} parent=15 // pred_check_branch
          %368 = sbr.rel (%p366) target = $region66
        $region65: #{run.1} parent=15 // pred_region
          %p369 = scmp.lt.s32.totalorder %s26, 1
          %s370 = scalar_select %p369, %s26, 1
          %p371 = scmp.lt.s32.totalorder %s27, 1
          %s372 = scalar_select %p371, %s27, 1
          %s373 = smul.addr %s370, 2
          %s374 = sadd.s32 %s372, %s373
          %s375 = smul.addr %s374, 8
          %s376 = scalar_lea.vmem %s3, %s375
        $region66: #{run.1} parent=15 // pred_fallthru
          _
        // Predicated region
        $region67: #{run.1} parent=15 // pred_check
          %p377 = pneg %p165
        $region68: #{run.1} parent=15 // pred_check_branch
          %379 = sbr.rel (%p377) target = $region70
        $region69: #{run.1} parent=15 // pred_region
          #allocation10 [shape = 'u32[6]{0}', space=smem, size = 0x18, scoped, tag = 'DMA stride descriptor']
          %s380 = sand.u32 %s155, 1
          %s381 = scalar_lea.sflag [#allocation5], %s380
          %s382 = sand.u32 %s155, 1
          %s383 = smul.addr %s382, 64
          %s384 = scalar_lea.vmem [#allocation4], %s383
          %s385 = smul.u32 4, %s27
          %s387 = ssub.s32 1024, 1024
          %388 = vsyncadd %s381, %s387
          %s389 = smul.addr %s26, 16
          %s390 = sadd.s32 %s385, %s389
          %s391 = smul.addr %s390, 128
          %s392 = scalar_lea.hbm %s4, %s391
          %s394 = sshll.u32 1, 14
          %s395 = sxor.u32 4294967295, %s394
          %s397 = sld [smem:[#allocation0]]
          %s398 = sadd.s32 2, %s397
          %s400 = sshll.u32 7, 26
          %s401 = sxor.u32 4294967295, %s400
          %s402 = sand.u32 0, %s401
          %s403 = sshll.u32 %s398, 26
          %s404 = sor.u32 %s402, %s403
          %s405 = sshll.u32 %s384, 4
          %s406 = int_to_ptr.vmem [resolvable:$true] %s405
          %412 = sst [smem:[#allocation10]] 1024
          %s413 = scalar_lea.smem [#allocation10], 1
          %414 = sst [smem:[%s413]] 512
          %s415 = scalar_lea.smem [#allocation10], 2
          %416 = sst [smem:[%s415]] 4
          %s417 = scalar_lea.smem [#allocation10], 3
          %418 = sst [smem:[%s417]] 128
          %s419 = scalar_lea.smem [#allocation10], 4
          %420 = sst [smem:[%s419]] 128
          %s421 = scalar_lea.smem [#allocation10], 5
          %422 = sst [smem:[%s421]] 8
          %424 = dma.general %s392, 1024, %s406, %s381, [#allocation9], [#allocation10], %s404, 0
        $region70: #{run.1} parent=15 // pred_fallthru
          _
        // Predicated region
        $region71: #{run.1} parent=15 // pred_check
          %p425 = pneg %p193
        $region72: #{run.1} parent=15 // pred_check_branch
          %427 = sbr.rel (%p425) target = $region74
        $region73: #{run.1} parent=15 // pred_region
          #allocation12 [shape = 'u32[6]{0}', space=smem, size = 0x18, scoped, tag = 'DMA stride descriptor']
          %s428 = sand.u32 %s19, 1
          %s429 = scalar_lea.sflag [#allocation7], %s428
          %s430 = sand.u32 %s183, 1
          %s431 = smul.addr %s430, 64
          %s432 = scalar_lea.vmem [#allocation6], %s431
          %s433 = smul.u32 4, %s27
          %s435 = ssub.s32 1024, 1024
          %436 = vsyncadd %s429, %s435
          %s437 = smul.addr %s26, 16
          %s438 = sadd.s32 %s433, %s437
          %s439 = smul.addr %s438, 128
          %s440 = scalar_lea.hbm %s5, %s439
          %s442 = sshll.u32 1, 14
          %s443 = sxor.u32 4294967295, %s442
          %s445 = sld [smem:[#allocation0]]
          %s446 = sadd.s32 2, %s445
          %s448 = sshll.u32 7, 26
          %s449 = sxor.u32 4294967295, %s448
          %s450 = sand.u32 0, %s449
          %s451 = sshll.u32 %s446, 26
          %s452 = sor.u32 %s450, %s451
          %s453 = sshll.u32 %s432, 4
          %s454 = int_to_ptr.vmem [resolvable:$true] %s453
          %460 = sst [smem:[#allocation12]] 1024
          %s461 = scalar_lea.smem [#allocation12], 1
          %462 = sst [smem:[%s461]] 512
          %s463 = scalar_lea.smem [#allocation12], 2
          %464 = sst [smem:[%s463]] 4
          %s465 = scalar_lea.smem [#allocation12], 3
          %466 = sst [smem:[%s465]] 128
          %s467 = scalar_lea.smem [#allocation12], 4
          %468 = sst [smem:[%s467]] 128
          %s469 = scalar_lea.smem [#allocation12], 5
          %470 = sst [smem:[%s469]] 8
          %472 = dma.general %s440, 1024, %s454, %s429, [#allocation11], [#allocation12], %s452, 0
        $region74: #{run.1} parent=15 // pred_fallthru
          _
        // Predicated region
        $region75: #{run.1} parent=15 // pred_check
          %p473 = pneg %p221
        $region76: #{run.1} parent=15 // pred_check_branch
          %475 = sbr.rel (%p473) target = $region78
        $region77: #{run.1} parent=15 // pred_region
          #allocation14 [shape = 'u32[6]{0}', space=smem, size = 0x18, scoped, tag = 'DMA stride descriptor']
          %s476 = sand.u32 %s19, 1
          %s477 = scalar_lea.sflag [#allocation7], %s476
          %s478 = sand.u32 %s211, 1
          %s479 = smul.addr %s478, 64
          %s480 = scalar_lea.vmem [#allocation8], %s479
          %s481 = smul.u32 4, %s27
          %s483 = ssub.s32 1024, 1024
          %484 = vsyncadd %s477, %s483
          %s485 = smul.addr %s26, 16
          %s486 = sadd.s32 %s481, %s485
          %s487 = smul.addr %s486, 128
          %s488 = scalar_lea.hbm %s6, %s487
          %s490 = sshll.u32 1, 14
          %s491 = sxor.u32 4294967295, %s490
          %s493 = sld [smem:[#allocation0]]
          %s494 = sadd.s32 2, %s493
          %s496 = sshll.u32 7, 26
          %s497 = sxor.u32 4294967295, %s496
          %s498 = sand.u32 0, %s497
          %s499 = sshll.u32 %s494, 26
          %s500 = sor.u32 %s498, %s499
          %s501 = sshll.u32 %s480, 4
          %s502 = int_to_ptr.vmem [resolvable:$true] %s501
          %508 = sst [smem:[#allocation14]] 1024
          %s509 = scalar_lea.smem [#allocation14], 1
          %510 = sst [smem:[%s509]] 512
          %s511 = scalar_lea.smem [#allocation14], 2
          %512 = sst [smem:[%s511]] 4
          %s513 = scalar_lea.smem [#allocation14], 3
          %514 = sst [smem:[%s513]] 128
          %s515 = scalar_lea.smem [#allocation14], 4
          %516 = sst [smem:[%s515]] 128
          %s517 = scalar_lea.smem [#allocation14], 5
          %518 = sst [smem:[%s517]] 8
          %520 = dma.general %s488, 1024, %s502, %s477, [#allocation13], [#allocation14], %s500, 0
        $region78: #{run.1} parent=15 // pred_fallthru
          _
      $region16: #{run.1} parent=5 // pred_fallthru
        _
      %p521 = scmp.le.s32.totalorder 1, %s19
      %p522 = scmp.lt.s32.totalorder %s19, 5
      %p523 = pnand %p521, %p522
      %p524 = pneg %p523
      // Predicated region
      $region79: #{run.1} parent=5 // pred_check
        _
      $region80: #{run.1} parent=5 // pred_check_branch
        %526 = sbr.rel (%p523) target = $region82
      $region81: #{run.1} parent=5 // pred_region
        %s527 = ssub.s32 %s19, 1
        %s528 = sand.u32 %s46, 1
        %s529 = sand.u32 %s46, 1
        %s530 = smul.addr %s529, 64
        %s531 = scalar_lea.vmem [#allocation3], %s530
        // Predicated region
        $region83: #{run.1} parent=81 // pred_check
          %p532 = pneg %p59
        $region84: #{run.1} parent=81 // pred_check_branch
          %534 = sbr.rel (%p532) target = $region86
        $region85: #{run.1} parent=81 // pred_region
          _
        $region86: #{run.1} parent=81 // pred_fallthru
          _
        %s535 = sand.u32 %s158, 1
        %s536 = scalar_lea.sflag [#allocation5], %s535
        %s537 = sand.u32 %s158, 1
        %s538 = smul.addr %s537, 64
        %s539 = scalar_lea.vmem [#allocation4], %s538
        // Predicated region
        $region87: #{run.1} parent=81 // pred_check
          %p540 = pneg %p171
        $region88: #{run.1} parent=81 // pred_check_branch
          %542 = sbr.rel (%p540) target = $region90
        $region89: #{run.1} parent=81 // pred_region
          %543 = dma.done %s536, 1024
        $region90: #{run.1} parent=81 // pred_fallthru
          _
        %s544 = sand.u32 %s24, 1
        %s545 = scalar_lea.sflag [#allocation7], %s544
        %s546 = sand.u32 %s186, 1
        %s547 = smul.addr %s546, 64
        %s548 = scalar_lea.vmem [#allocation6], %s547
        // Predicated region
        $region91: #{run.1} parent=81 // pred_check
          %p549 = pneg %p199
        $region92: #{run.1} parent=81 // pred_check_branch
          %551 = sbr.rel (%p549) target = $region94
        $region93: #{run.1} parent=81 // pred_region
          %552 = dma.done %s545, 1024
        $region94: #{run.1} parent=81 // pred_fallthru
          _
        %s553 = sand.u32 %s24, 1
        %s554 = scalar_lea.sflag [#allocation7], %s553
        %s555 = sand.u32 %s214, 1
        %s556 = smul.addr %s555, 64
        %s557 = scalar_lea.vmem [#allocation8], %s556
        // Predicated region
        $region95: #{run.1} parent=81 // pred_check
          %p558 = pneg %p227
        $region96: #{run.1} parent=81 // pred_check_branch
          %560 = sbr.rel (%p558) target = $region98
        $region97: #{run.1} parent=81 // pred_region
          %561 = dma.done %s554, 1024
        $region98: #{run.1} parent=81 // pred_fallthru
          _
        %s562 = sand.u32 %s46, 1
        %s563 = sand.u32 %s46, 1
        %s564 = smul.addr %s563, 64
        %s565 = scalar_lea.vmem [#allocation3], %s564
        %p566 = pneg %p59
        %p567 = pneg %p56
        %p568 = scmp.lt.s32.totalorder %s28, 1
        %s569 = scalar_select %p568, %s28, 1
        %p570 = scmp.lt.s32.totalorder %s29, 1
        %s571 = scalar_select %p570, %s29, 1
        %s572 = smul.addr %s569, 2
        %s573 = sadd.s32 %s571, %s572
        %s574 = smul.addr %s573, 8
        %s575 = scalar_lea.vmem %s1, %s574
        %p576 = pneg %p87
        %p577 = pneg %p84
        %p578 = scmp.lt.s32.totalorder %s28, 1
        %s579 = scalar_select %p578, %s28, 1
        %p580 = scmp.lt.s32.totalorder %s29, 1
        %s581 = scalar_select %p580, %s29, 1
        %s582 = smul.addr %s579, 2
        %s583 = sadd.s32 %s581, %s582
        %s584 = smul.addr %s583, 8
        %s585 = scalar_lea.vmem %s2, %s584
        %p586 = pneg %p115
        %p587 = pneg %p112
        %p588 = scmp.lt.s32.totalorder %s28, 1
        %s589 = scalar_select %p588, %s28, 1
        %p590 = scmp.lt.s32.totalorder %s29, 1
        %s591 = scalar_select %p590, %s29, 1
        %s592 = smul.addr %s589, 2
        %s593 = sadd.s32 %s591, %s592
        %s594 = smul.addr %s593, 8
        %s595 = scalar_lea.vmem %s3, %s594
        %p596 = pneg %p143
        %p597 = pneg %p140
        %s598 = sand.u32 %s158, 1
        %s599 = scalar_lea.sflag [#allocation5], %s598
        %s600 = sand.u32 %s158, 1
        %s601 = smul.addr %s600, 64
        %s602 = scalar_lea.vmem [#allocation4], %s601
        %p603 = pneg %p171
        %p604 = pneg %p168
        %s605 = sand.u32 %s24, 1
        %s606 = scalar_lea.sflag [#allocation7], %s605
        %s607 = sand.u32 %s186, 1
        %s608 = smul.addr %s607, 64
        %s609 = scalar_lea.vmem [#allocation6], %s608
        %p610 = pneg %p199
        %p611 = pneg %p196
        %s612 = sand.u32 %s24, 1
        %s613 = scalar_lea.sflag [#allocation7], %s612
        %s614 = sand.u32 %s214, 1
        %s615 = smul.addr %s614, 64
        %s616 = scalar_lea.vmem [#allocation8], %s615
        %p617 = pneg %p227
        %p618 = pneg %p224
        %p619 = pneg %p253
        %p620 = pneg %p250
        %p621 = scmp.lt.s32.totalorder %s28, 1
        %s622 = scalar_select %p621, %s28, 1
        %s623 = smul.addr %s622, 12
        %s624 = smul.addr %s623, 8
        %s625 = scalar_lea.vmem %s7, %s624
        %s626 = smul.u32 4, %s29
        %p627 = scmp.lt.s32.totalorder %s28, 1
        %s628 = scalar_select %p627, %s28, 1
        %p629 = scmp.lt.s32.totalorder %s29, 1
        %s630 = scalar_select %p629, %s29, 1
        %s631 = smul.addr %s628, 2
        %s632 = sadd.s32 %s630, %s631
        %s633 = smul.addr %s632, 8
        %s634 = scalar_lea.vmem %s1, %s633
        %p635 = scmp.lt.s32.totalorder %s28, 1
        %s636 = scalar_select %p635, %s28, 1
        %p637 = scmp.lt.s32.totalorder %s29, 1
        %s638 = scalar_select %p637, %s29, 1
        %s639 = smul.addr %s636, 2
        %s640 = sadd.s32 %s638, %s639
        %s641 = smul.addr %s640, 8
        %s642 = scalar_lea.vmem %s2, %s641
        %p643 = scmp.lt.s32.totalorder %s28, 1
        %s644 = scalar_select %p643, %s28, 1
        %p645 = scmp.lt.s32.totalorder %s29, 1
        %s646 = scalar_select %p645, %s29, 1
        %s647 = smul.addr %s644, 2
        %s648 = sadd.s32 %s646, %s647
        %s649 = smul.addr %s648, 8
        %s650 = scalar_lea.vmem %s3, %s649
        %s651 = smul.u32 4, %s29
        %s652 = smul.u32 4, %s29
        %s653 = smul.u32 4, %s29
        %p654 = scmp.lt.s32.totalorder %s28, 1
        %s655 = scalar_select %p654, %s28, 1
        %s656 = smul.addr %s655, 12
        %s657 = smul.addr %s656, 8
        %s658 = scalar_lea.vmem %s7, %s657
        %p659 = scmp.eq.s32.totalorder %s29, 0
        // Predicated region
        $region99: #{run.1} parent=81 // pred_check
          %p660 = pneg %p659
        $region100: #{run.1} parent=81 // pred_check_branch
          %662 = sbr.rel (%p660) target = $region102
        $region101: #{run.1} parent=81 // pred_region
          %663 = vst [vmem:[%s658] sm:$0xff] 0.0
          %664 = vst [vmem:[%s658 + $0x8] sm:$0xff] 0.0
          %665 = vst [vmem:[%s658 + $0x10] sm:$0xff] 0.0
          %666 = vst [vmem:[%s658 + $0x18] sm:$0xff] 0.0
          %667 = vst [vmem:[%s658 + $0x20] sm:$0xff] 0.0
          %668 = vst [vmem:[%s658 + $0x28] sm:$0xff] 0.0
          %669 = vst [vmem:[%s658 + $0x30] sm:$0xff] 0.0
          %670 = vst [vmem:[%s658 + $0x38] sm:$0xff] 0.0
          %671 = vst [vmem:[%s658 + $0x40] sm:$0xff] 0.0
          %672 = vst [vmem:[%s658 + $0x48] sm:$0xff] 0.0
          %673 = vst [vmem:[%s658 + $0x50] sm:$0xff] 0.0
          %674 = vst [vmem:[%s658 + $0x58] sm:$0xff] 0.0
          %675 = vst [vmem:[#allocation2] sm:$0x7f] 0.0
        $region102: #{run.1} parent=81 // pred_fallthru
          _
        %v676 = vld [vmem:[%s531] sm:$0xff]
        %v677 = vld [vmem:[%s531 + $0x8] sm:$0xff]
        %v678 = vld [vmem:[%s531 + $0x10] sm:$0xff]
        %v679 = vld [vmem:[%s531 + $0x18] sm:$0xff]
        %s680 = scalar_lea.vmem %s531, 32 [#allocation3]
        %v681 = vld [vmem:[%s680] sm:$0xff]
        %v682 = vld [vmem:[%s680 + $0x8] sm:$0xff]
        %v683 = vld [vmem:[%s680 + $0x10] sm:$0xff]
        %v684 = vld [vmem:[%s680 + $0x18] sm:$0xff]
        %v685 = vld [vmem:[%s642] sm:$0xff]
        %v686 = vunpack.c.0.s8 %v685
        %v687 = vunpack.c.1.s8 %v685
        %v688 = vunpack.c.2.s8 %v685
        %v689 = vunpack.c.3.s8 %v685
        %v690 = vcvt.s32.f32 %v686
        %v691 = vcvt.s32.f32 %v687
        %v692 = vcvt.s32.f32 %v688
        %v693 = vcvt.s32.f32 %v689
        %v694 = vld [vmem:[%s650] sm:$0xff]
        %v695 = vunpack.c.0.s8 %v694
        %v696 = vunpack.c.1.s8 %v694
        %v697 = vunpack.c.2.s8 %v694
        %v698 = vunpack.c.3.s8 %v694
        %v699 = vcvt.s32.f32 %v695
        %v700 = vcvt.s32.f32 %v696
        %v701 = vcvt.s32.f32 %v697
        %v702 = vcvt.s32.f32 %v698
        %v703 = vld [vmem:[%s634] sm:$0xff]
        %v704 = vunpack.c.0.s8 %v703
        %v705 = vunpack.c.1.s8 %v703
        %v706 = vunpack.c.2.s8 %v703
        %v707 = vunpack.c.3.s8 %v703
        %v708 = vcvt.s32.f32 %v704
        %v709 = vcvt.s32.f32 %v705
        %v710 = vcvt.s32.f32 %v706
        %v711 = vcvt.s32.f32 %v707
        %vm712 = vcmp.gt.f32.partialorder %v708, 0.0
        %vm713 = vcmp.gt.f32.partialorder %v709, 0.0
        %vm714 = vcmp.gt.f32.partialorder %v710, 0.0
        %vm715 = vcmp.gt.f32.partialorder %v711, 0.0
        %v716 = vmul.f32 %v676, %v676
        %v717 = vmul.f32 %v677, %v677
        %v718 = vmul.f32 %v678, %v678
        %v719 = vmul.f32 %v679, %v679
        %v720 = vmul.f32 %v681, %v681
        %v721 = vmul.f32 %v682, %v682
        %v722 = vmul.f32 %v683, %v683
        %v723 = vmul.f32 %v684, %v684
        %v724 = vadd.f32 %v716, %v720
        %v725 = vadd.f32 %v717, %v721
        %v726 = vadd.f32 %v718, %v722
        %v727 = vadd.f32 %v719, %v723
        %vm728 = vcmp.lt.f32.partialorder %v724, 160000.0
        %vm729 = vcmp.lt.f32.partialorder %v725, 160000.0
        %vm730 = vcmp.lt.f32.partialorder %v726, 160000.0
        %vm731 = vcmp.lt.f32.partialorder %v727, 160000.0
        %vm732 = vmand %vm712, %vm728
        %vm733 = vmand %vm713, %vm729
        %vm734 = vmand %vm714, %vm730
        %vm735 = vmand %vm715, %vm731
        %v736 = vsel %vm732, 1, 0
        %v737 = vsel %vm733, 1, 0
        %v738 = vsel %vm734, 1, 0
        %v739 = vsel %vm735, 1, 0
        %v740 = vcvt.s32.f32 %v736
        %v741 = vcvt.s32.f32 %v737
        %v742 = vcvt.s32.f32 %v738
        %v743 = vcvt.s32.f32 %v739
        %v744 = vlaneseq
        %v745 = vshrl.u32 %v744, 7
        %v746 = vadd.s32 %v745, 8
        %v747 = vadd.s32 %v745, 16
        %v748 = vadd.s32 %v745, 24
        %v749 = vlaneseq
        %v750 = vand.u32 %v749, 127
        %s751 = smul.u32 %s29, 32
        %v752 = vstv %s751
        %v753 = vadd.s32 %v745, %v752
        %v754 = vadd.s32 %v746, %v752
        %v755 = vadd.s32 %v747, %v752
        %v756 = vadd.s32 %v748, %v752
        %vm757 = vcmp.ge.s32.totalorder %v753, 1
        %vm758 = vcmp.ge.s32.totalorder %v754, 1
        %vm759 = vcmp.ge.s32.totalorder %v755, 1
        %vm760 = vcmp.ge.s32.totalorder %v756, 1
        %vm761 = vcmp.ge.s32.totalorder %v750, 1
        %vm762 = vcmp.lt.s32.totalorder %v750, 127
        %vm763 = vcmp.eq.s32.totalorder %v745, 0
        %vm764 = vcmp.eq.s32.totalorder %v746, 0
        %vm765 = vcmp.eq.s32.totalorder %v747, 0
        %vm766 = vcmp.eq.s32.totalorder %v748, 0
        %vm767 = vcmp.eq.f32.partialorder %v690, %v699
        %vm768 = vcmp.eq.f32.partialorder %v691, %v700
        %vm769 = vcmp.eq.f32.partialorder %v692, %v701
        %vm770 = vcmp.eq.f32.partialorder %v693, %v702
        %vm771 = vmand %vm767, %vm732
        %vm772 = vmand %vm768, %vm733
        %vm773 = vmand %vm769, %vm734
        %vm774 = vmand %vm770, %vm735
        %v775 = vsel %vm771, 1, 0
        %v776 = vsel %vm772, 1, 0
        %v777 = vsel %vm773, 1, 0
        %v778 = vsel %vm774, 1, 0
        %v779 = vcvt.s32.f32 %v775
        %v780 = vcvt.s32.f32 %v776
        %v781 = vcvt.s32.f32 %v777
        %v782 = vcvt.s32.f32 %v778
        %783 = vrot.lane.b32.xlu0 %v779, 127
        %v784 = vpop.permute.xlu0 %783
        %785 = vrot.lane.b32.xlu0 %v780, 127
        %v786 = vpop.permute.xlu0 %785
        %787 = vrot.lane.b32.xlu0 %v781, 127
        %v788 = vpop.permute.xlu0 %787
        %789 = vrot.lane.b32.xlu0 %v782, 127
        %v790 = vpop.permute.xlu0 %789
        %791 = vrot.lane.b32.xlu0 %v690, 127
        %v792 = vpop.permute.xlu0 %791
        %793 = vrot.lane.b32.xlu0 %v691, 127
        %v794 = vpop.permute.xlu0 %793
        %795 = vrot.lane.b32.xlu0 %v692, 127
        %v796 = vpop.permute.xlu0 %795
        %797 = vrot.lane.b32.xlu0 %v693, 127
        %v798 = vpop.permute.xlu0 %797
        %v799 = vld [vmem:[#allocation2] sm:$0x1]
        %v800 = vrot.slane %v690, 7
        %v801 = vrot.slane %v691, 7
        %v802 = vrot.slane %v692, 7
        %v803 = vrot.slane %v693, 7
        %vm804 = vcmp.lt.s32.totalorder %v745, 1
        %v805 = vsel %vm804, %v802, %v803
        %v806 = vsel %vm804, %v801, %v802
        %v807 = vsel %vm804, %v800, %v801
        %v808 = vsel %vm804, %v803, %v800
        %v809 = vlaneseq
        %v810 = vshrl.u32 %v809, 7
        %v811 = vsub.s32 0, %v810
        %v812 = vrot.slane %v799, %v811
        %v813 = vsel %vm763, %v812, %v808
        %v814 = vsel %vm764, %v812, %v807
        %v815 = vsel %vm765, %v812, %v806
        %v816 = vsel %vm766, %v812, %v805
        %vm817 = vmand %vm757, %vm761
        %vm818 = vmand %vm758, %vm761
        %vm819 = vmand %vm759, %vm761
        %vm820 = vmand %vm760, %vm761
        %vm821 = vmand %vm817, %vm771
        %vm822 = vmand %vm818, %vm772
        %vm823 = vmand %vm819, %vm773
        %vm824 = vmand %vm820, %vm774
        %v825 = vsel %vm821, 1, 0
        %v826 = vsel %vm822, 1, 0
        %v827 = vsel %vm823, 1, 0
        %v828 = vsel %vm824, 1, 0
        %v829 = vcvt.s32.f32 %v825
        %v830 = vcvt.s32.f32 %v826
        %v831 = vcvt.s32.f32 %v827
        %v832 = vcvt.s32.f32 %v828
        %vm833 = vcmp.eq.f32.partialorder %v813, %v690
        %vm834 = vcmp.eq.f32.partialorder %v814, %v691
        %vm835 = vcmp.eq.f32.partialorder %v815, %v692
        %vm836 = vcmp.eq.f32.partialorder %v816, %v693
        %vm837 = vmand %vm821, %vm833
        %vm838 = vmand %vm822, %vm834
        %vm839 = vmand %vm823, %vm835
        %vm840 = vmand %vm824, %vm836
        %v841 = vsel %vm837, 1, 0
        %v842 = vsel %vm838, 1, 0
        %v843 = vsel %vm839, 1, 0
        %v844 = vsel %vm840, 1, 0
        %v845 = vcvt.s32.f32 %v841
        %v846 = vcvt.s32.f32 %v842
        %v847 = vcvt.s32.f32 %v843
        %v848 = vcvt.s32.f32 %v844
        %vm849 = vmand %vm757, %vm762
        %vm850 = vmand %vm758, %vm762
        %vm851 = vmand %vm759, %vm762
        %vm852 = vmand %vm760, %vm762
        %vm853 = vcmp.eq.f32.partialorder %v690, %v792
        %vm854 = vcmp.eq.f32.partialorder %v691, %v794
        %vm855 = vcmp.eq.f32.partialorder %v692, %v796
        %vm856 = vcmp.eq.f32.partialorder %v693, %v798
        %vm857 = vmand %vm849, %vm853
        %vm858 = vmand %vm850, %vm854
        %vm859 = vmand %vm851, %vm855
        %vm860 = vmand %vm852, %vm856
        %v861 = vsel %vm857, 1, 0
        %v862 = vsel %vm858, 1, 0
        %v863 = vsel %vm859, 1, 0
        %v864 = vsel %vm860, 1, 0
        %v865 = vcvt.s32.f32 %v861
        %v866 = vcvt.s32.f32 %v862
        %v867 = vcvt.s32.f32 %v863
        %v868 = vcvt.s32.f32 %v864
        %v869 = vmul.f32 %v865, %v784
        %v870 = vmul.f32 %v866, %v786
        %v871 = vmul.f32 %v867, %v788
        %v872 = vmul.f32 %v868, %v790
        %s873 = scalar_lea.vmem %s658, 48
        %v874 = vld [vmem:[%s873] sm:$0xff]
        %v875 = vadd.f32 %v740, %v741
        %v876 = vadd.f32 %v875, %v742
        %v877 = vadd.f32 %v876, %v743
        %v878 = vadd.f32 %v874, %v877
        %879 = vst [vmem:[%s873] sm:$0xff] %v878
        %s880 = scalar_lea.vmem %s658, 56
        %v881 = vld [vmem:[%s880] sm:$0xff]
        %v882 = vadd.f32 %v829, %v830
        %v883 = vadd.f32 %v882, %v831
        %v884 = vadd.f32 %v883, %v832
        %v885 = vadd.f32 %v881, %v884
        %886 = vst [vmem:[%s880] sm:$0xff] %v885
        %887 = vst [vmem:[#allocation2 - $0x7] sm:$0x80] %v693
        %v888 = vld [vmem:[%s539] sm:$0xff]
        %v889 = vld [vmem:[%s539 + $0x8] sm:$0xff]
        %v890 = vld [vmem:[%s539 + $0x10] sm:$0xff]
        %v891 = vld [vmem:[%s539 + $0x18] sm:$0xff]
        %s892 = scalar_lea.vmem %s539, 32 [#allocation4]
        %v893 = vld [vmem:[%s892] sm:$0xff]
        %v894 = vld [vmem:[%s892 + $0x8] sm:$0xff]
        %v895 = vld [vmem:[%s892 + $0x10] sm:$0xff]
        %v896 = vld [vmem:[%s892 + $0x18] sm:$0xff]
        %v897 = vsub.f32 %v888, %v676
        %v898 = vsub.f32 %v889, %v677
        %v899 = vsub.f32 %v890, %v678
        %v900 = vsub.f32 %v891, %v679
        %v901 = vsub.f32 %v893, %v681
        %v902 = vsub.f32 %v894, %v682
        %v903 = vsub.f32 %v895, %v683
        %v904 = vsub.f32 %v896, %v684
        %v905 = vand.u32 2147483647, %v897
        %v906 = vand.u32 2147483647, %v898
        %v907 = vand.u32 2147483647, %v899
        %v908 = vand.u32 2147483647, %v900
        %v909 = vand.u32 2147483647, %v901
        %v910 = vand.u32 2147483647, %v902
        %v911 = vand.u32 2147483647, %v903
        %v912 = vand.u32 2147483647, %v904
        %v913 = vadd.f32 %v905, %v909
        %v914 = vadd.f32 %v906, %v910
        %v915 = vadd.f32 %v907, %v911
        %v916 = vadd.f32 %v908, %v912
        %v917 = vmul.f32 %v913, %v740
        %v918 = vmul.f32 %v914, %v741
        %v919 = vmul.f32 %v915, %v742
        %v920 = vmul.f32 %v916, %v743
        %v921 = vld [vmem:[%s658] sm:$0xff]
        %v922 = vadd.f32 %v917, %v918
        %v923 = vadd.f32 %v922, %v919
        %v924 = vadd.f32 %v923, %v920
        %v925 = vadd.f32 %v921, %v924
        %926 = vst [vmem:[%s658] sm:$0xff] %v925
        %927 = vrot.lane.b32.xlu0 %v888, 127
        %v928 = vpop.permute.xlu0 %927
        %929 = vrot.lane.b32.xlu0 %v889, 127
        %v930 = vpop.permute.xlu0 %929
        %931 = vrot.lane.b32.xlu0 %v890, 127
        %v932 = vpop.permute.xlu0 %931
        %933 = vrot.lane.b32.xlu0 %v891, 127
        %v934 = vpop.permute.xlu0 %933
        %935 = vrot.lane.b32.xlu0 %v893, 127
        %v936 = vpop.permute.xlu0 %935
        %937 = vrot.lane.b32.xlu0 %v894, 127
        %v938 = vpop.permute.xlu0 %937
        %939 = vrot.lane.b32.xlu0 %v895, 127
        %v940 = vpop.permute.xlu0 %939
        %941 = vrot.lane.b32.xlu0 %v896, 127
        %v942 = vpop.permute.xlu0 %941
        %v943 = vld [vmem:[#allocation2 + $0x1] sm:$0x1]
        %v944 = vrot.slane %v888, 7
        %v945 = vrot.slane %v889, 7
        %v946 = vrot.slane %v890, 7
        %v947 = vrot.slane %v891, 7
        %v948 = vsel %vm804, %v946, %v947
        %v949 = vsel %vm804, %v945, %v946
        %v950 = vsel %vm804, %v944, %v945
        %v951 = vsel %vm804, %v947, %v944
        %v952 = vlaneseq
        %v953 = vshrl.u32 %v952, 7
        %v954 = vsub.s32 0, %v953
        %v955 = vrot.slane %v943, %v954
        %v956 = vsel %vm763, %v955, %v951
        %v957 = vsel %vm764, %v955, %v950
        %v958 = vsel %vm765, %v955, %v949
        %v959 = vsel %vm766, %v955, %v948
        %v960 = vld [vmem:[#allocation2 + $0x2] sm:$0x1]
        %v961 = vrot.slane %v893, 7
        %v962 = vrot.slane %v894, 7
        %v963 = vrot.slane %v895, 7
        %v964 = vrot.slane %v896, 7
        %v965 = vsel %vm804, %v963, %v964
        %v966 = vsel %vm804, %v962, %v963
        %v967 = vsel %vm804, %v961, %v962
        %v968 = vsel %vm804, %v964, %v961
        %v969 = vlaneseq
        %v970 = vshrl.u32 %v969, 7
        %v971 = vsub.s32 0, %v970
        %v972 = vrot.slane %v960, %v971
        %v973 = vsel %vm763, %v972, %v968
        %v974 = vsel %vm764, %v972, %v967
        %v975 = vsel %vm765, %v972, %v966
        %v976 = vsel %vm766, %v972, %v965
        %v977 = vsub.f32 %v888, %v928
        %v978 = vsub.f32 %v889, %v930
        %v979 = vsub.f32 %v890, %v932
        %v980 = vsub.f32 %v891, %v934
        %v981 = vand.u32 2147483647, %v977
        %v982 = vand.u32 2147483647, %v978
        %v983 = vand.u32 2147483647, %v979
        %v984 = vand.u32 2147483647, %v980
        %v985 = vsub.f32 %v893, %v936
        %v986 = vsub.f32 %v894, %v938
        %v987 = vsub.f32 %v895, %v940
        %v988 = vsub.f32 %v896, %v942
        %v989 = vand.u32 2147483647, %v985
        %v990 = vand.u32 2147483647, %v986
        %v991 = vand.u32 2147483647, %v987
        %v992 = vand.u32 2147483647, %v988
        %v993 = vadd.f32 %v981, %v989
        %v994 = vadd.f32 %v982, %v990
        %v995 = vadd.f32 %v983, %v991
        %v996 = vadd.f32 %v984, %v992
        %v997 = vmul.f32 %v869, %v993
        %v998 = vmul.f32 %v870, %v994
        %v999 = vmul.f32 %v871, %v995
        %v1000 = vmul.f32 %v872, %v996
        %v1001 = vsub.f32 %v956, %v888
        %v1002 = vsub.f32 %v957, %v889
        %v1003 = vsub.f32 %v958, %v890
        %v1004 = vsub.f32 %v959, %v891
        %v1005 = vand.u32 2147483647, %v1001
        %v1006 = vand.u32 2147483647, %v1002
        %v1007 = vand.u32 2147483647, %v1003
        %v1008 = vand.u32 2147483647, %v1004
        %v1009 = vsub.f32 %v973, %v893
        %v1010 = vsub.f32 %v974, %v894
        %v1011 = vsub.f32 %v975, %v895
        %v1012 = vsub.f32 %v976, %v896
        %v1013 = vand.u32 2147483647, %v1009
        %v1014 = vand.u32 2147483647, %v1010
        %v1015 = vand.u32 2147483647, %v1011
        %v1016 = vand.u32 2147483647, %v1012
        %v1017 = vadd.f32 %v1005, %v1013
        %v1018 = vadd.f32 %v1006, %v1014
        %v1019 = vadd.f32 %v1007, %v1015
        %v1020 = vadd.f32 %v1008, %v1016
        %v1021 = vmul.f32 %v845, %v1017
        %v1022 = vmul.f32 %v846, %v1018
        %v1023 = vmul.f32 %v847, %v1019
        %v1024 = vmul.f32 %v848, %v1020
        %v1025 = vadd.f32 %v997, %v1021
        %v1026 = vadd.f32 %v998, %v1022
        %v1027 = vadd.f32 %v999, %v1023
        %v1028 = vadd.f32 %v1000, %v1024
        %s1029 = scalar_lea.vmem %s658, 8
        %v1030 = vld [vmem:[%s1029] sm:$0xff]
        %v1031 = vadd.f32 %v1025, %v1026
        %v1032 = vadd.f32 %v1031, %v1027
        %v1033 = vadd.f32 %v1032, %v1028
        %v1034 = vadd.f32 %v1030, %v1033
        %1035 = vst [vmem:[%s1029] sm:$0xff] %v1034
        %1036 = vst [vmem:[#allocation2 - $0x6] sm:$0x80] %v891
        %1037 = vst [vmem:[#allocation2 - $0x5] sm:$0x80] %v896
        %v1038 = vld [vmem:[%s548] sm:$0xff]
        %v1039 = vld [vmem:[%s548 + $0x8] sm:$0xff]
        %v1040 = vld [vmem:[%s548 + $0x10] sm:$0xff]
        %v1041 = vld [vmem:[%s548 + $0x18] sm:$0xff]
        %s1042 = scalar_lea.vmem %s548, 32 [#allocation6]
        %v1043 = vld [vmem:[%s1042] sm:$0xff]
        %v1044 = vld [vmem:[%s1042 + $0x8] sm:$0xff]
        %v1045 = vld [vmem:[%s1042 + $0x10] sm:$0xff]
        %v1046 = vld [vmem:[%s1042 + $0x18] sm:$0xff]
        %v1047 = vsub.f32 %v1038, %v676
        %v1048 = vsub.f32 %v1039, %v677
        %v1049 = vsub.f32 %v1040, %v678
        %v1050 = vsub.f32 %v1041, %v679
        %v1051 = vsub.f32 %v1043, %v681
        %v1052 = vsub.f32 %v1044, %v682
        %v1053 = vsub.f32 %v1045, %v683
        %v1054 = vsub.f32 %v1046, %v684
        %v1055 = vand.u32 2147483647, %v1047
        %v1056 = vand.u32 2147483647, %v1048
        %v1057 = vand.u32 2147483647, %v1049
        %v1058 = vand.u32 2147483647, %v1050
        %v1059 = vand.u32 2147483647, %v1051
        %v1060 = vand.u32 2147483647, %v1052
        %v1061 = vand.u32 2147483647, %v1053
        %v1062 = vand.u32 2147483647, %v1054
        %v1063 = vadd.f32 %v1055, %v1059
        %v1064 = vadd.f32 %v1056, %v1060
        %v1065 = vadd.f32 %v1057, %v1061
        %v1066 = vadd.f32 %v1058, %v1062
        %v1067 = vmul.f32 %v1063, %v740
        %v1068 = vmul.f32 %v1064, %v741
        %v1069 = vmul.f32 %v1065, %v742
        %v1070 = vmul.f32 %v1066, %v743
        %s1071 = scalar_lea.vmem %s658, 16
        %v1072 = vld [vmem:[%s1071] sm:$0xff]
        %v1073 = vadd.f32 %v1067, %v1068
        %v1074 = vadd.f32 %v1073, %v1069
        %v1075 = vadd.f32 %v1074, %v1070
        %v1076 = vadd.f32 %v1072, %v1075
        %1077 = vst [vmem:[%s1071] sm:$0xff] %v1076
        %1078 = vrot.lane.b32.xlu0 %v1038, 127
        %v1079 = vpop.permute.xlu0 %1078
        %1080 = vrot.lane.b32.xlu0 %v1039, 127
        %v1081 = vpop.permute.xlu0 %1080
        %1082 = vrot.lane.b32.xlu0 %v1040, 127
        %v1083 = vpop.permute.xlu0 %1082
        %1084 = vrot.lane.b32.xlu0 %v1041, 127
        %v1085 = vpop.permute.xlu0 %1084
        %1086 = vrot.lane.b32.xlu0 %v1043, 127
        %v1087 = vpop.permute.xlu0 %1086
        %1088 = vrot.lane.b32.xlu0 %v1044, 127
        %v1089 = vpop.permute.xlu0 %1088
        %1090 = vrot.lane.b32.xlu0 %v1045, 127
        %v1091 = vpop.permute.xlu0 %1090
        %1092 = vrot.lane.b32.xlu0 %v1046, 127
        %v1093 = vpop.permute.xlu0 %1092
        %v1094 = vld [vmem:[#allocation2 + $0x3] sm:$0x1]
        %v1095 = vrot.slane %v1038, 7
        %v1096 = vrot.slane %v1039, 7
        %v1097 = vrot.slane %v1040, 7
        %v1098 = vrot.slane %v1041, 7
        %v1099 = vsel %vm804, %v1097, %v1098
        %v1100 = vsel %vm804, %v1096, %v1097
        %v1101 = vsel %vm804, %v1095, %v1096
        %v1102 = vsel %vm804, %v1098, %v1095
        %v1103 = vlaneseq
        %v1104 = vshrl.u32 %v1103, 7
        %v1105 = vsub.s32 0, %v1104
        %v1106 = vrot.slane %v1094, %v1105
        %v1107 = vsel %vm763, %v1106, %v1102
        %v1108 = vsel %vm764, %v1106, %v1101
        %v1109 = vsel %vm765, %v1106, %v1100
        %v1110 = vsel %vm766, %v1106, %v1099
        %v1111 = vld [vmem:[#allocation2 + $0x4] sm:$0x1]
        %v1112 = vrot.slane %v1043, 7
        %v1113 = vrot.slane %v1044, 7
        %v1114 = vrot.slane %v1045, 7
        %v1115 = vrot.slane %v1046, 7
        %v1116 = vsel %vm804, %v1114, %v1115
        %v1117 = vsel %vm804, %v1113, %v1114
        %v1118 = vsel %vm804, %v1112, %v1113
        %v1119 = vsel %vm804, %v1115, %v1112
        %v1120 = vlaneseq
        %v1121 = vshrl.u32 %v1120, 7
        %v1122 = vsub.s32 0, %v1121
        %v1123 = vrot.slane %v1111, %v1122
        %v1124 = vsel %vm763, %v1123, %v1119
        %v1125 = vsel %vm764, %v1123, %v1118
        %v1126 = vsel %vm765, %v1123, %v1117
        %v1127 = vsel %vm766, %v1123, %v1116
        %v1128 = vsub.f32 %v1038, %v1079
        %v1129 = vsub.f32 %v1039, %v1081
        %v1130 = vsub.f32 %v1040, %v1083
        %v1131 = vsub.f32 %v1041, %v1085
        %v1132 = vand.u32 2147483647, %v1128
        %v1133 = vand.u32 2147483647, %v1129
        %v1134 = vand.u32 2147483647, %v1130
        %v1135 = vand.u32 2147483647, %v1131
        %v1136 = vsub.f32 %v1043, %v1087
        %v1137 = vsub.f32 %v1044, %v1089
        %v1138 = vsub.f32 %v1045, %v1091
        %v1139 = vsub.f32 %v1046, %v1093
        %v1140 = vand.u32 2147483647, %v1136
        %v1141 = vand.u32 2147483647, %v1137
        %v1142 = vand.u32 2147483647, %v1138
        %v1143 = vand.u32 2147483647, %v1139
        %v1144 = vadd.f32 %v1132, %v1140
        %v1145 = vadd.f32 %v1133, %v1141
        %v1146 = vadd.f32 %v1134, %v1142
        %v1147 = vadd.f32 %v1135, %v1143
        %v1148 = vmul.f32 %v869, %v1144
        %v1149 = vmul.f32 %v870, %v1145
        %v1150 = vmul.f32 %v871, %v1146
        %v1151 = vmul.f32 %v872, %v1147
        %v1152 = vsub.f32 %v1107, %v1038
        %v1153 = vsub.f32 %v1108, %v1039
        %v1154 = vsub.f32 %v1109, %v1040
        %v1155 = vsub.f32 %v1110, %v1041
        %v1156 = vand.u32 2147483647, %v1152
        %v1157 = vand.u32 2147483647, %v1153
        %v1158 = vand.u32 2147483647, %v1154
        %v1159 = vand.u32 2147483647, %v1155
        %v1160 = vsub.f32 %v1124, %v1043
        %v1161 = vsub.f32 %v1125, %v1044
        %v1162 = vsub.f32 %v1126, %v1045
        %v1163 = vsub.f32 %v1127, %v1046
        %v1164 = vand.u32 2147483647, %v1160
        %v1165 = vand.u32 2147483647, %v1161
        %v1166 = vand.u32 2147483647, %v1162
        %v1167 = vand.u32 2147483647, %v1163
        %v1168 = vadd.f32 %v1156, %v1164
        %v1169 = vadd.f32 %v1157, %v1165
        %v1170 = vadd.f32 %v1158, %v1166
        %v1171 = vadd.f32 %v1159, %v1167
        %v1172 = vmul.f32 %v845, %v1168
        %v1173 = vmul.f32 %v846, %v1169
        %v1174 = vmul.f32 %v847, %v1170
        %v1175 = vmul.f32 %v848, %v1171
        %v1176 = vadd.f32 %v1148, %v1172
        %v1177 = vadd.f32 %v1149, %v1173
        %v1178 = vadd.f32 %v1150, %v1174
        %v1179 = vadd.f32 %v1151, %v1175
        %s1180 = scalar_lea.vmem %s658, 24
        %v1181 = vld [vmem:[%s1180] sm:$0xff]
        %v1182 = vadd.f32 %v1176, %v1177
        %v1183 = vadd.f32 %v1182, %v1178
        %v1184 = vadd.f32 %v1183, %v1179
        %v1185 = vadd.f32 %v1181, %v1184
        %1186 = vst [vmem:[%s1180] sm:$0xff] %v1185
        %1187 = vst [vmem:[#allocation2 - $0x4] sm:$0x80] %v1041
        %1188 = vst [vmem:[#allocation2 - $0x3] sm:$0x80] %v1046
        %v1189 = vld [vmem:[%s557] sm:$0xff]
        %v1190 = vld [vmem:[%s557 + $0x8] sm:$0xff]
        %v1191 = vld [vmem:[%s557 + $0x10] sm:$0xff]
        %v1192 = vld [vmem:[%s557 + $0x18] sm:$0xff]
        %s1193 = scalar_lea.vmem %s557, 32 [#allocation8]
        %v1194 = vld [vmem:[%s1193] sm:$0xff]
        %v1195 = vld [vmem:[%s1193 + $0x8] sm:$0xff]
        %v1196 = vld [vmem:[%s1193 + $0x10] sm:$0xff]
        %v1197 = vld [vmem:[%s1193 + $0x18] sm:$0xff]
        %v1198 = vsub.f32 %v1189, %v676
        %v1199 = vsub.f32 %v1190, %v677
        %v1200 = vsub.f32 %v1191, %v678
        %v1201 = vsub.f32 %v1192, %v679
        %v1202 = vsub.f32 %v1194, %v681
        %v1203 = vsub.f32 %v1195, %v682
        %v1204 = vsub.f32 %v1196, %v683
        %v1205 = vsub.f32 %v1197, %v684
        %v1206 = vand.u32 2147483647, %v1198
        %v1207 = vand.u32 2147483647, %v1199
        %v1208 = vand.u32 2147483647, %v1200
        %v1209 = vand.u32 2147483647, %v1201
        %v1210 = vand.u32 2147483647, %v1202
        %v1211 = vand.u32 2147483647, %v1203
        %v1212 = vand.u32 2147483647, %v1204
        %v1213 = vand.u32 2147483647, %v1205
        %v1214 = vadd.f32 %v1206, %v1210
        %v1215 = vadd.f32 %v1207, %v1211
        %v1216 = vadd.f32 %v1208, %v1212
        %v1217 = vadd.f32 %v1209, %v1213
        %v1218 = vmul.f32 %v1214, %v740
        %v1219 = vmul.f32 %v1215, %v741
        %v1220 = vmul.f32 %v1216, %v742
        %v1221 = vmul.f32 %v1217, %v743
        %s1222 = scalar_lea.vmem %s658, 32
        %v1223 = vld [vmem:[%s1222] sm:$0xff]
        %v1224 = vadd.f32 %v1218, %v1219
        %v1225 = vadd.f32 %v1224, %v1220
        %v1226 = vadd.f32 %v1225, %v1221
        %v1227 = vadd.f32 %v1223, %v1226
        %1228 = vst [vmem:[%s1222] sm:$0xff] %v1227
        %1229 = vrot.lane.b32.xlu0 %v1189, 127
        %v1230 = vpop.permute.xlu0 %1229
        %1231 = vrot.lane.b32.xlu0 %v1190, 127
        %v1232 = vpop.permute.xlu0 %1231
        %1233 = vrot.lane.b32.xlu0 %v1191, 127
        %v1234 = vpop.permute.xlu0 %1233
        %1235 = vrot.lane.b32.xlu0 %v1192, 127
        %v1236 = vpop.permute.xlu0 %1235
        %1237 = vrot.lane.b32.xlu0 %v1194, 127
        %v1238 = vpop.permute.xlu0 %1237
        %1239 = vrot.lane.b32.xlu0 %v1195, 127
        %v1240 = vpop.permute.xlu0 %1239
        %1241 = vrot.lane.b32.xlu0 %v1196, 127
        %v1242 = vpop.permute.xlu0 %1241
        %1243 = vrot.lane.b32.xlu0 %v1197, 127
        %v1244 = vpop.permute.xlu0 %1243
        %v1245 = vld [vmem:[#allocation2 + $0x5] sm:$0x1]
        %v1246 = vrot.slane %v1189, 7
        %v1247 = vrot.slane %v1190, 7
        %v1248 = vrot.slane %v1191, 7
        %v1249 = vrot.slane %v1192, 7
        %v1250 = vsel %vm804, %v1248, %v1249
        %v1251 = vsel %vm804, %v1247, %v1248
        %v1252 = vsel %vm804, %v1246, %v1247
        %v1253 = vsel %vm804, %v1249, %v1246
        %v1254 = vlaneseq
        %v1255 = vshrl.u32 %v1254, 7
        %v1256 = vsub.s32 0, %v1255
        %v1257 = vrot.slane %v1245, %v1256
        %v1258 = vsel %vm763, %v1257, %v1253
        %v1259 = vsel %vm764, %v1257, %v1252
        %v1260 = vsel %vm765, %v1257, %v1251
        %v1261 = vsel %vm766, %v1257, %v1250
        %v1262 = vld [vmem:[#allocation2 + $0x6] sm:$0x1]
        %v1263 = vrot.slane %v1194, 7
        %v1264 = vrot.slane %v1195, 7
        %v1265 = vrot.slane %v1196, 7
        %v1266 = vrot.slane %v1197, 7
        %v1267 = vsel %vm804, %v1265, %v1266
        %v1268 = vsel %vm804, %v1264, %v1265
        %v1269 = vsel %vm804, %v1263, %v1264
        %v1270 = vsel %vm804, %v1266, %v1263
        %v1271 = vlaneseq
        %v1272 = vshrl.u32 %v1271, 7
        %v1273 = vsub.s32 0, %v1272
        %v1274 = vrot.slane %v1262, %v1273
        %v1275 = vsel %vm763, %v1274, %v1270
        %v1276 = vsel %vm764, %v1274, %v1269
        %v1277 = vsel %vm765, %v1274, %v1268
        %v1278 = vsel %vm766, %v1274, %v1267
        %v1279 = vsub.f32 %v1189, %v1230
        %v1280 = vsub.f32 %v1190, %v1232
        %v1281 = vsub.f32 %v1191, %v1234
        %v1282 = vsub.f32 %v1192, %v1236
        %v1283 = vand.u32 2147483647, %v1279
        %v1284 = vand.u32 2147483647, %v1280
        %v1285 = vand.u32 2147483647, %v1281
        %v1286 = vand.u32 2147483647, %v1282
        %v1287 = vsub.f32 %v1194, %v1238
        %v1288 = vsub.f32 %v1195, %v1240
        %v1289 = vsub.f32 %v1196, %v1242
        %v1290 = vsub.f32 %v1197, %v1244
        %v1291 = vand.u32 2147483647, %v1287
        %v1292 = vand.u32 2147483647, %v1288
        %v1293 = vand.u32 2147483647, %v1289
        %v1294 = vand.u32 2147483647, %v1290
        %v1295 = vadd.f32 %v1283, %v1291
        %v1296 = vadd.f32 %v1284, %v1292
        %v1297 = vadd.f32 %v1285, %v1293
        %v1298 = vadd.f32 %v1286, %v1294
        %v1299 = vmul.f32 %v869, %v1295
        %v1300 = vmul.f32 %v870, %v1296
        %v1301 = vmul.f32 %v871, %v1297
        %v1302 = vmul.f32 %v872, %v1298
        %v1303 = vsub.f32 %v1258, %v1189
        %v1304 = vsub.f32 %v1259, %v1190
        %v1305 = vsub.f32 %v1260, %v1191
        %v1306 = vsub.f32 %v1261, %v1192
        %v1307 = vand.u32 2147483647, %v1303
        %v1308 = vand.u32 2147483647, %v1304
        %v1309 = vand.u32 2147483647, %v1305
        %v1310 = vand.u32 2147483647, %v1306
        %v1311 = vsub.f32 %v1275, %v1194
        %v1312 = vsub.f32 %v1276, %v1195
        %v1313 = vsub.f32 %v1277, %v1196
        %v1314 = vsub.f32 %v1278, %v1197
        %v1315 = vand.u32 2147483647, %v1311
        %v1316 = vand.u32 2147483647, %v1312
        %v1317 = vand.u32 2147483647, %v1313
        %v1318 = vand.u32 2147483647, %v1314
        %v1319 = vadd.f32 %v1307, %v1315
        %v1320 = vadd.f32 %v1308, %v1316
        %v1321 = vadd.f32 %v1309, %v1317
        %v1322 = vadd.f32 %v1310, %v1318
        %v1323 = vmul.f32 %v845, %v1319
        %v1324 = vmul.f32 %v846, %v1320
        %v1325 = vmul.f32 %v847, %v1321
        %v1326 = vmul.f32 %v848, %v1322
        %v1327 = vadd.f32 %v1299, %v1323
        %v1328 = vadd.f32 %v1300, %v1324
        %v1329 = vadd.f32 %v1301, %v1325
        %v1330 = vadd.f32 %v1302, %v1326
        %s1331 = scalar_lea.vmem %s658, 40
        %v1332 = vld [vmem:[%s1331] sm:$0xff]
        %v1333 = vadd.f32 %v1327, %v1328
        %v1334 = vadd.f32 %v1333, %v1329
        %v1335 = vadd.f32 %v1334, %v1330
        %v1336 = vadd.f32 %v1332, %v1335
        %1337 = vst [vmem:[%s1331] sm:$0xff] %v1336
        %1338 = vst [vmem:[#allocation2 - $0x2] sm:$0x80] %v1192
        %1339 = vst [vmem:[#allocation2 - $0x1] sm:$0x80] %v1197
        %v1340 = vmul.f32 %v1198, %v1198
        %v1341 = vmul.f32 %v1199, %v1199
        %v1342 = vmul.f32 %v1200, %v1200
        %v1343 = vmul.f32 %v1201, %v1201
        %v1344 = vmul.f32 %v1202, %v1202
        %v1345 = vmul.f32 %v1203, %v1203
        %v1346 = vmul.f32 %v1204, %v1204
        %v1347 = vmul.f32 %v1205, %v1205
        %v1348 = vadd.f32 %v1340, %v1344
        %v1349 = vadd.f32 %v1341, %v1345
        %v1350 = vadd.f32 %v1342, %v1346
        %v1351 = vadd.f32 %v1343, %v1347
        %v1352 = vrsqrt.pop %v1348
        %v1353 = vmul.f32 %v1348, %v1352
        %vm1354 = vcmp.eq.f32.partialorder %v1348, inf
        %v1355 = vsel %vm1354, %v1348, %v1353
        %vm1356 = vcmp.eq.f32.partialorder %v1348, 0.0
        %v1357 = vand.u32 %v1348, 2147483648
        %v1358 = vsel %vm1356, %v1357, %v1355
        %v1359 = vrsqrt.pop %v1349
        %v1360 = vmul.f32 %v1349, %v1359
        %vm1361 = vcmp.eq.f32.partialorder %v1349, inf
        %v1362 = vsel %vm1361, %v1349, %v1360
        %vm1363 = vcmp.eq.f32.partialorder %v1349, 0.0
        %v1364 = vand.u32 %v1349, 2147483648
        %v1365 = vsel %vm1363, %v1364, %v1362
        %v1366 = vrsqrt.pop %v1350
        %v1367 = vmul.f32 %v1350, %v1366
        %vm1368 = vcmp.eq.f32.partialorder %v1350, inf
        %v1369 = vsel %vm1368, %v1350, %v1367
        %vm1370 = vcmp.eq.f32.partialorder %v1350, 0.0
        %v1371 = vand.u32 %v1350, 2147483648
        %v1372 = vsel %vm1370, %v1371, %v1369
        %v1373 = vrsqrt.pop %v1351
        %v1374 = vmul.f32 %v1351, %v1373
        %vm1375 = vcmp.eq.f32.partialorder %v1351, inf
        %v1376 = vsel %vm1375, %v1351, %v1374
        %vm1377 = vcmp.eq.f32.partialorder %v1351, 0.0
        %v1378 = vand.u32 %v1351, 2147483648
        %v1379 = vsel %vm1377, %v1378, %v1376
        %v1380 = vmul.f32 %v1358, %v740
        %v1381 = vmul.f32 %v1365, %v741
        %v1382 = vmul.f32 %v1372, %v742
        %v1383 = vmul.f32 %v1379, %v743
        %s1384 = scalar_lea.vmem %s658, 64
        %v1385 = vld [vmem:[%s1384] sm:$0xff]
        %v1386 = vadd.f32 %v1380, %v1381
        %v1387 = vadd.f32 %v1386, %v1382
        %v1388 = vadd.f32 %v1387, %v1383
        %v1389 = vadd.f32 %v1385, %v1388
        %1390 = vst [vmem:[%s1384] sm:$0xff] %v1389
        %vm1391 = vcmp.lt.f32.partialorder %v1348, 1.0
        %vm1392 = vcmp.lt.f32.partialorder %v1349, 1.0
        %vm1393 = vcmp.lt.f32.partialorder %v1350, 1.0
        %vm1394 = vcmp.lt.f32.partialorder %v1351, 1.0
        %vm1395 = vmand %vm732, %vm1391
        %vm1396 = vmand %vm733, %vm1392
        %vm1397 = vmand %vm734, %vm1393
        %vm1398 = vmand %vm735, %vm1394
        %v1399 = vsel %vm1395, 1, 0
        %v1400 = vsel %vm1396, 1, 0
        %v1401 = vsel %vm1397, 1, 0
        %v1402 = vsel %vm1398, 1, 0
        %v1403 = vcvt.s32.f32 %v1399
        %v1404 = vcvt.s32.f32 %v1400
        %v1405 = vcvt.s32.f32 %v1401
        %v1406 = vcvt.s32.f32 %v1402
        %s1407 = scalar_lea.vmem %s658, 72
        %v1408 = vld [vmem:[%s1407] sm:$0xff]
        %v1409 = vadd.f32 %v1403, %v1404
        %v1410 = vadd.f32 %v1409, %v1405
        %v1411 = vadd.f32 %v1410, %v1406
        %v1412 = vadd.f32 %v1408, %v1411
        %1413 = vst [vmem:[%s1407] sm:$0xff] %v1412
        %vm1414 = vcmp.lt.f32.partialorder %v1348, 9.0
        %vm1415 = vcmp.lt.f32.partialorder %v1349, 9.0
        %vm1416 = vcmp.lt.f32.partialorder %v1350, 9.0
        %vm1417 = vcmp.lt.f32.partialorder %v1351, 9.0
        %vm1418 = vmand %vm732, %vm1414
        %vm1419 = vmand %vm733, %vm1415
        %vm1420 = vmand %vm734, %vm1416
        %vm1421 = vmand %vm735, %vm1417
        %v1422 = vsel %vm1418, 1, 0
        %v1423 = vsel %vm1419, 1, 0
        %v1424 = vsel %vm1420, 1, 0
        %v1425 = vsel %vm1421, 1, 0
        %v1426 = vcvt.s32.f32 %v1422
        %v1427 = vcvt.s32.f32 %v1423
        %v1428 = vcvt.s32.f32 %v1424
        %v1429 = vcvt.s32.f32 %v1425
        %s1430 = scalar_lea.vmem %s658, 80
        %v1431 = vld [vmem:[%s1430] sm:$0xff]
        %v1432 = vadd.f32 %v1426, %v1427
        %v1433 = vadd.f32 %v1432, %v1428
        %v1434 = vadd.f32 %v1433, %v1429
        %v1435 = vadd.f32 %v1431, %v1434
        %1436 = vst [vmem:[%s1430] sm:$0xff] %v1435
        %vm1437 = vcmp.lt.f32.partialorder %v1348, 25.0
        %vm1438 = vcmp.lt.f32.partialorder %v1349, 25.0
        %vm1439 = vcmp.lt.f32.partialorder %v1350, 25.0
        %vm1440 = vcmp.lt.f32.partialorder %v1351, 25.0
        %vm1441 = vmand %vm732, %vm1437
        %vm1442 = vmand %vm733, %vm1438
        %vm1443 = vmand %vm734, %vm1439
        %vm1444 = vmand %vm735, %vm1440
        %v1445 = vsel %vm1441, 1, 0
        %v1446 = vsel %vm1442, 1, 0
        %v1447 = vsel %vm1443, 1, 0
        %v1448 = vsel %vm1444, 1, 0
        %v1449 = vcvt.s32.f32 %v1445
        %v1450 = vcvt.s32.f32 %v1446
        %v1451 = vcvt.s32.f32 %v1447
        %v1452 = vcvt.s32.f32 %v1448
        %s1453 = scalar_lea.vmem %s658, 88
        %v1454 = vld [vmem:[%s1453] sm:$0xff]
        %v1455 = vadd.f32 %v1449, %v1450
        %v1456 = vadd.f32 %v1455, %v1451
        %v1457 = vadd.f32 %v1456, %v1452
        %v1458 = vadd.f32 %v1454, %v1457
        %1459 = vst [vmem:[%s1453] sm:$0xff] %v1458
        %p1460 = scmp.lt.s32.totalorder %s28, 1
        %s1461 = scalar_select %p1460, %s28, 1
        %s1462 = smul.addr %s1461, 12
        %s1463 = smul.addr %s1462, 8
        %s1464 = scalar_lea.vmem %s7, %s1463
        // Predicated region
        $region103: #{run.1} parent=81 // pred_check
          %p1465 = pneg %p250
        $region104: #{run.1} parent=81 // pred_check_branch
          %1467 = sbr.rel (%p1465) target = $region106
        $region105: #{run.1} parent=81 // pred_region
          _
        $region106: #{run.1} parent=81 // pred_fallthru
          _
      $region82: #{run.1} parent=5 // pred_fallthru
        _
      %p1468 = scmp.le.s32.totalorder 2, %s19
      // Predicated region
      $region107: #{run.1} parent=5 // pred_check
        %p1469 = pneg %p1468
      $region108: #{run.1} parent=5 // pred_check_branch
        %1471 = sbr.rel (%p1469) target = $region110
      $region109: #{run.1} parent=5 // pred_region
        %s1472 = ssub.s32 %s19, 2
        // Predicated region
        $region111: #{run.1} parent=109 // pred_check
          %p1473 = pneg %p256
        $region112: #{run.1} parent=109 // pred_check_branch
          %1475 = sbr.rel (%p1473) target = $region114
        $region113: #{run.1} parent=109 // pred_region
          %p1476 = scmp.lt.s32.totalorder %s30, 1
          %s1477 = scalar_select %p1476, %s30, 1
          %s1478 = smul.addr %s1477, 12
          %s1479 = smul.addr %s1478, 8
          %s1480 = scalar_lea.vmem %s7, %s1479
        $region114: #{run.1} parent=109 // pred_fallthru
          _
      $region110: #{run.1} parent=5 // pred_fallthru
        _
    $region6: #{run.1} parent=1 // loop_footer
      %s23 = sadd.s32 1, %s19
    $region7: #{run.1} parent=1 // loop_footer_branch
      %18 = sbr.rel target = $region3
    $region8: #{run.1} parent=1 // loop_exit
      _
    %1481 = vsyncpa [#allocation5], 1
    %s1482 = scalar_lea.sflag [#allocation5], 1
    %1483 = vsyncpa %s1482, 1
    %1484 = vsyncpa [#allocation7], 1
    %s1485 = scalar_lea.sflag [#allocation7], 1
    %1486 = vsyncpa %s1485, 1

</llo_original>
